<compile_context>
chip_gen: v7x
topology: tpu7x:2x2x1
jax: 0.10.0
libtpu: 0.0.40
codegen_flags: <defaults>
</compile_context>

<pallas_src>
import functools

import jax
import jax.numpy as jnp
from jax import lax
from jax.experimental import pallas as pl
from jax.experimental.pallas import tpu as pltpu


def _round_up(x, m):
    return (x + m - 1) // m * m


def _sigmoid(x):
    # Explicit formulation; guaranteed Mosaic-supported (exp on the EUP).
    return 1.0 / (1.0 + jnp.exp(-x))


def _lstm_fc_kernel(x_ref, wih_ref, whh_ref, b_ref, wfc_ref, bfc_ref,
                    out_ref, gx_scr, h_scr, c_scr, *,
                    seq_len, chunk_t, batch_p, hidden_p, unroll, needs_mask):
    Bp = batch_p
    Hp = hidden_p
    bf16 = jnp.bfloat16
    chunk_idx = pl.program_id(0)

    # ---- init persistent h/c state on the first chunk ----
    @pl.when(chunk_idx == 0)
    def _():
        h_scr[...] = jnp.zeros_like(h_scr)
        c_scr[...] = jnp.zeros_like(c_scr)

    # ---- 1) Input projection for this whole chunk (bias folded), off the serial chain.
    #      (chunk_t*Bp, Ip)bf16 @ (Ip, 4*Hp)bf16 -> f32, + (1, 4*Hp)f32
    gx_scr[...] = (jnp.dot(x_ref[...], wih_ref[...],
                           preferred_element_type=jnp.float32)
                   + b_ref[...])

    # ---- 2) Serial time recurrence; h/c carried as f32 values (1 vreg each). ----
    def step(t, carry):
        h, c = carry
        row = pl.multiple_of(t * Bp, Bp)
        gx = gx_scr[pl.ds(row, Bp), :]                       # (Bp, 4*Hp) f32
        # Load W_hh^T from VMEM inside the step (keep its live range short) and feed the
        # MXU bf16 operands with f32 accumulation.
        gates = gx + jnp.dot(h.astype(bf16), whh_ref[...],
                             preferred_element_type=jnp.float32)
        # Lane-aligned gate blocks (each exactly Hp = k*128 lanes wide), PyTorch order i,f,g,o.
        i_g = _sigmoid(gates[:, 0 * Hp:1 * Hp])
        f_g = _sigmoid(gates[:, 1 * Hp:2 * Hp])
        g_g = jnp.tanh(gates[:, 2 * Hp:3 * Hp])
        o_g = _sigmoid(gates[:, 3 * Hp:4 * Hp])
        c_new = f_g * c + i_g * g_g
        h_new = o_g * jnp.tanh(c_new)
        if needs_mask:
            # Only when T is not a multiple of chunk_t: freeze the state on padded steps.
            valid = (chunk_idx * chunk_t + t) < seq_len
            h_new = jnp.where(valid, h_new, h)
            c_new = jnp.where(valid, c_new, c)
        return h_new, c_new

    h_T, c_T = lax.fori_loop(0, chunk_t, step, (h_scr[...], c_scr[...]),
                             unroll=unroll)
    h_scr[...] = h_T
    c_scr[...] = c_T

    # ---- 3) FC head on the final hidden state (runs once, on the last chunk). ----
    @pl.when(chunk_idx == pl.num_programs(0) - 1)
    def _():
        out_ref[...] = (jnp.dot(h_T.astype(bf16), wfc_ref[...],
                                preferred_element_type=jnp.float32)
                        + bfc_ref[...])


def lstm_model_forward(x, params, *, chunk_t_max=256):
    """x: (B, T, I) float32 (batch_first, like the PyTorch module). Returns (B, O) f32."""
    w_ih, w_hh, b_ih, b_hh, w_fc, b_fc = (
        params["w_ih"], params["w_hh"], params["b_ih"], params["b_hh"],
        params["w_fc"], params["b_fc"])

    B, T, I = x.shape
    H = w_hh.shape[1]
    O = w_fc.shape[0]

    Bp = _round_up(max(B, 8), 8)     # sublane-aligned batch
    Hp = _round_up(H, 128)           # lane-aligned per-gate width
    Ip = _round_up(max(I, 1), 8)     # K dim of the per-chunk input matmul
    Op = _round_up(O, 128)           # lane-dense output store

    # Time chunking keeps the gates scratch + x DMA bounded in VMEM.
    if T <= chunk_t_max:
        chunk_t, n_chunks = T, 1
    else:
        chunk_t = chunk_t_max
        n_chunks = pl.cdiv(T, chunk_t)
    Tp = n_chunks * chunk_t
    needs_mask = (Tp != T)

    f32, bf16 = jnp.float32, jnp.bfloat16

    # --- glue: time-major, padded, bf16 input, flattened to (Tp*Bp, Ip) (single pad op) ---
    x_p = jnp.zeros((Tp, Bp, Ip), bf16).at[:T, :B, :I].set(
        jnp.transpose(x, (1, 0, 2)).astype(bf16))
    x_flat = x_p.reshape(Tp * Bp, Ip)

    # --- gate-blocked, lane-padded weights: (rows_p, 4, Hp) -> (rows_p, 4*Hp) ---
    def pad_gates(w_t, rows, rows_p):
        w4 = w_t.reshape(rows, 4, H)
        out = jnp.zeros((rows_p, 4, Hp), f32).at[:rows, :, :H].set(w4)
        return out.reshape(rows_p, 4 * Hp)

    wih_p = pad_gates(jnp.transpose(w_ih).astype(f32), I, Ip).astype(bf16)   # (Ip, 4Hp)
    whh_p = pad_gates(jnp.transpose(w_hh).astype(f32), H, Hp).astype(bf16)   # (Hp, 4Hp)
    b_p = pad_gates((b_ih + b_hh).astype(f32).reshape(1, 4 * H), 1, 1)       # (1, 4Hp) f32

    wfc_p = jnp.zeros((Hp, Op), f32).at[:H, :O].set(
        jnp.transpose(w_fc).astype(f32)).astype(bf16)                        # (Hp, Op)
    bfc_p = jnp.zeros((1, Op), f32).at[0, :O].set(b_fc.astype(f32))          # (1, Op)

    unroll = True if chunk_t <= 32 else 8

    kernel = functools.partial(
        _lstm_fc_kernel,
        seq_len=T, chunk_t=chunk_t, batch_p=Bp, hidden_p=Hp,
        unroll=unroll, needs_mask=needs_mask)

    # Rough VMEM requirement (double-buffered inputs + scratch), to set the scoped limit
    # explicitly (v5e defaults to 16 MiB).
    bytes_x = 2 * chunk_t * Bp * Ip * 2
    bytes_w = 2 * (Ip * 4 * Hp * 2 + Hp * 4 * Hp * 2 + 4 * Hp * 4
                   + Hp * Op * 2 + Op * 4)
    bytes_scr = chunk_t * Bp * 4 * Hp * 4 + 2 * Bp * Hp * 4
    bytes_out = 2 * Bp * Op * 4
    needed = bytes_x + bytes_w + bytes_scr + bytes_out
    vmem_limit = int(min(60 * 1024 * 1024, max(32 * 1024 * 1024, 2 * needed)))

    out_p = pl.pallas_call(
        kernel,
        out_shape=jax.ShapeDtypeStruct((Bp, Op), jnp.float32),
        grid_spec=pltpu.PrefetchScalarGridSpec(
            num_scalar_prefetch=0,
            grid=(n_chunks,),
            in_specs=[
                pl.BlockSpec((chunk_t * Bp, Ip), lambda c: (c, 0)),  # x, one time chunk
                pl.BlockSpec((Ip, 4 * Hp), lambda c: (0, 0)),        # W_ih^T (gate-blocked, bf16)
                pl.BlockSpec((Hp, 4 * Hp), lambda c: (0, 0)),        # W_hh^T (gate-blocked, bf16)
                pl.BlockSpec((1, 4 * Hp), lambda c: (0, 0)),         # b_ih + b_hh (f32)
                pl.BlockSpec((Hp, Op), lambda c: (0, 0)),            # W_fc^T (bf16)
                pl.BlockSpec((1, Op), lambda c: (0, 0)),             # b_fc (f32)
            ],
            out_specs=pl.BlockSpec((Bp, Op), lambda c: (0, 0)),
            scratch_shapes=[
                pltpu.VMEM((chunk_t * Bp, 4 * Hp), jnp.float32),     # gates_x for this chunk
                pltpu.VMEM((Bp, Hp), jnp.float32),                   # persistent h
                pltpu.VMEM((Bp, Hp), jnp.float32),                   # persistent c
            ],
        ),
        compiler_params=pltpu.CompilerParams(
            dimension_semantics=("arbitrary",),
            vmem_limit_bytes=vmem_limit,
        ),
    )(x_flat, wih_p, whh_p, b_p, wfc_p, bfc_p)

    return out_p[:B, :O]


def lstm_model_reference(x, params):
    """Pure-JAX reference matching torch.nn.LSTM + Linear semantics (f32 state math)."""
    w_ih, w_hh, b_ih, b_hh, w_fc, b_fc = (
        params["w_ih"], params["w_hh"], params["b_ih"], params["b_hh"],
        params["w_fc"], params["b_fc"])
    B, T, I = x.shape
    H = w_hh.shape[1]

    def step(carry, x_t):
        h, c = carry
        gates = x_t @ w_ih.T + b_ih + h @ w_hh.T + b_hh
        i_g = jax.nn.sigmoid(gates[:, 0:H])
        f_g = jax.nn.sigmoid(gates[:, H:2 * H])
        g_g = jnp.tanh(gates[:, 2 * H:3 * H])
        o_g = jax.nn.sigmoid(gates[:, 3 * H:4 * H])
        c_new = f_g * c + i_g * g_g
        h_new = o_g * jnp.tanh(c_new)
        return (h_new, c_new), None

    h0 = jnp.zeros((B, H), jnp.float32)
    c0 = jnp.zeros((B, H), jnp.float32)
    (h_T, _), _ = lax.scan(step, (h0, c0), jnp.transpose(x, (1, 0, 2)))
    return h_T @ w_fc.T + b_fc


def init_params(key, input_size=1, hidden_size=50, output_size=1):
    """Deterministic init mimicking PyTorch's uniform(-1/sqrt(H), 1/sqrt(H))."""
    k = 1.0 / jnp.sqrt(jnp.float32(hidden_size))
    ks = jax.random.split(key, 6)
    u = lambda kk, shape, bound: jax.random.uniform(
        kk, shape, jnp.float32, -bound, bound)
    return {
        "w_ih": u(ks[0], (4 * hidden_size, input_size), k),
        "w_hh": u(ks[1], (4 * hidden_size, hidden_size), k),
        "b_ih": u(ks[2], (4 * hidden_size,), k),
        "b_hh": u(ks[3], (4 * hidden_size,), k),
        "w_fc": u(ks[4], (output_size, hidden_size), k),
        "b_fc": u(ks[5], (output_size,), k),
    }


if __name__ == "__main__":
    key = jax.random.PRNGKey(0)
    k_param, k_x = jax.random.split(key)

    B, T, I, H, O = 4, 8, 1, 50, 1
    params = init_params(k_param, input_size=I, hidden_size=H, output_size=O)
    x = jax.random.normal(k_x, (B, T, I), jnp.float32)

    out = lstm_model_forward(x, params)
    out = jax.block_until_ready(out)

    ref = lstm_model_reference(x, params)
    assert out.shape == (B, O)
    # Kernel matmuls run with explicit bf16 operands (f32 accumulate) — the native MXU
    # regime the XLA reference is also in by default; tolerance covers that regime.
    assert jnp.allclose(out, ref, atol=1e-2, rtol=1e-2), (out, ref)

    print("KERNEL_OK")
</pallas_src>

<mosaic_0001>
module attributes {stable_mosaic.version = 11 : i64} {
  func.func @_lstm_fc_kernel(%arg0: i32, %arg1: memref<64x8xbf16, #tpu.memory_space<vmem>>, %arg2: memref<8x512xbf16, #tpu.memory_space<vmem>>, %arg3: memref<128x512xbf16, #tpu.memory_space<vmem>>, %arg4: memref<1x512xf32, #tpu.memory_space<vmem>>, %arg5: memref<128x128xbf16, #tpu.memory_space<vmem>>, %arg6: memref<1x128xf32, #tpu.memory_space<vmem>>, %arg7: memref<8x128xf32, #tpu.memory_space<vmem>>, %arg8: memref<64x512xf32, #tpu.memory_space<vmem>>, %arg9: memref<8x128xf32, #tpu.memory_space<vmem>>, %arg10: memref<8x128xf32, #tpu.memory_space<vmem>>) attributes {dimension_semantics = [#tpu.dimension_semantics<arbitrary>], iteration_bounds = array<i64: 1>, scalar_prefetch = 0 : i64, scratch_operands = 3 : i64, tpu.core_type = #tpu.core_type<tc>, window_params = [{transform_indices = @transform_0, window_bounds = array<i64: 64, 8>}, {pipeline_mode = #tpu.pipeline_mode<synchronous>, transform_indices = @transform_1, window_bounds = array<i64: 8, 512>}, {pipeline_mode = #tpu.pipeline_mode<synchronous>, transform_indices = @transform_2, window_bounds = array<i64: 128, 512>}, {pipeline_mode = #tpu.pipeline_mode<synchronous>, transform_indices = @transform_3, window_bounds = array<i64: 1, 512>}, {pipeline_mode = #tpu.pipeline_mode<synchronous>, transform_indices = @transform_4, window_bounds = array<i64: 128, 128>}, {pipeline_mode = #tpu.pipeline_mode<synchronous>, transform_indices = @transform_5, window_bounds = array<i64: 1, 128>}, {pipeline_mode = #tpu.pipeline_mode<synchronous>, transform_indices = @transform_6, window_bounds = array<i64: 8, 128>}]} {
    %c0_i32 = arith.constant 0 : i32
    %0 = arith.cmpi eq, %arg0, %c0_i32 : i32
    %1 = arith.extui %0 : i1 to i32
    %c0_i32_0 = arith.constant 0 : i32
    %2 = arith.cmpi ne, %1, %c0_i32_0 : i32
    scf.if %2 {
      %cst_131 = arith.constant 0.000000e+00 : f32
      %329 = vector.broadcast %cst_131 : f32 to vector<8x128xf32>
      %c0_132 = arith.constant 0 : index
      %c0_133 = arith.constant 0 : index
      %330 = vector.load %arg9[%c0_132, %c0_133] : memref<8x128xf32, #tpu.memory_space<vmem>>, vector<8x128xf32>
      tpu.vector_store %arg9[%c0_132, %c0_133], %329 {strides = array<i32>} : memref<8x128xf32, #tpu.memory_space<vmem>>, vector<8x128xf32>,
      %cst_134 = arith.constant 0.000000e+00 : f32
      %331 = vector.broadcast %cst_134 : f32 to vector<8x128xf32>
      %c0_135 = arith.constant 0 : index
      %c0_136 = arith.constant 0 : index
      %332 = vector.load %arg10[%c0_135, %c0_136] : memref<8x128xf32, #tpu.memory_space<vmem>>, vector<8x128xf32>
      tpu.vector_store %arg10[%c0_135, %c0_136], %331 {strides = array<i32>} : memref<8x128xf32, #tpu.memory_space<vmem>>, vector<8x128xf32>,
    } else {
    }
    %c0 = arith.constant 0 : index
    %c0_1 = arith.constant 0 : index
    %3 = vector.load %arg1[%c0, %c0_1] : memref<64x8xbf16, #tpu.memory_space<vmem>>, vector<64x8xbf16>
    %c0_2 = arith.constant 0 : index
    %c0_3 = arith.constant 0 : index
    %4 = vector.load %arg2[%c0_2, %c0_3] : memref<8x512xbf16, #tpu.memory_space<vmem>>, vector<8x512xbf16>
    %cst = arith.constant dense<0.000000e+00> : vector<64x512xf32>
    %5 = tpu.matmul %3, %4, %cst {dimension_numbers = #tpu.dot_dimension_numbers<[1], [0], [0], [1], [0, 0, 1, 1], [], []>} : vector<64x8xbf16>, vector<8x512xbf16>, vector<64x512xf32> -> vector<64x512xf32>
    %c0_4 = arith.constant 0 : index
    %c0_5 = arith.constant 0 : index
    %6 = vector.load %arg4[%c0_4, %c0_5] : memref<1x512xf32, #tpu.memory_space<vmem>>, vector<1x512xf32>
    %7 = vector.broadcast %6 : vector<1x512xf32> to vector<64x512xf32>
    %8 = arith.addf %5, %7 : vector<64x512xf32>
    %c0_6 = arith.constant 0 : index
    %c0_7 = arith.constant 0 : index
    %9 = vector.load %arg8[%c0_6, %c0_7] : memref<64x512xf32, #tpu.memory_space<vmem>>, vector<64x512xf32>
    tpu.vector_store %arg8[%c0_6, %c0_7], %8 {strides = array<i32>} : memref<64x512xf32, #tpu.memory_space<vmem>>, vector<64x512xf32>,
    %c0_8 = arith.constant 0 : index
    %c0_9 = arith.constant 0 : index
    %10 = vector.load %arg9[%c0_8, %c0_9] : memref<8x128xf32, #tpu.memory_space<vmem>>, vector<8x128xf32>
    %c0_10 = arith.constant 0 : index
    %c0_11 = arith.constant 0 : index
    %11 = vector.load %arg10[%c0_10, %c0_11] : memref<8x128xf32, #tpu.memory_space<vmem>>, vector<8x128xf32>
    %c0_i32_12 = arith.constant 0 : i32
    %c8_i32 = arith.constant 8 : i32
    %12 = arith.muli %c0_i32_12, %c8_i32 : i32
    %13 = tpu.assume_multiple %12, 8 : i32
    %14 = arith.index_cast %13 : i32 to index
    %c0_13 = arith.constant 0 : index
    %15 = vector.load %arg8[%14, %c0_13] : memref<64x512xf32, #tpu.memory_space<vmem>>, vector<8x512xf32>
    %16 = arith.truncf %10 : vector<8x128xf32> to vector<8x128xbf16>
    %c0_14 = arith.constant 0 : index
    %c0_15 = arith.constant 0 : index
    %17 = vector.load %arg3[%c0_14, %c0_15] : memref<128x512xbf16, #tpu.memory_space<vmem>>, vector<128x512xbf16>
    %cst_16 = arith.constant dense<0.000000e+00> : vector<8x512xf32>
    %18 = tpu.matmul %16, %17, %cst_16 {dimension_numbers = #tpu.dot_dimension_numbers<[1], [0], [0], [1], [0, 0, 1, 1], [], []>} : vector<8x128xbf16>, vector<128x512xbf16>, vector<8x512xf32> -> vector<8x512xf32>
    %19 = arith.addf %15, %18 : vector<8x512xf32>
    %20 = vector.extract_strided_slice %19 {offsets = [0, 0], sizes = [8, 128], strides = [1, 1]} : vector<8x512xf32> to vector<8x128xf32>
    %cst_17 = arith.constant 0.000000e+00 : f32
    %21 = vector.broadcast %cst_17 : f32 to vector<8x128xf32>
    %22 = arith.subf %21, %20 : vector<8x128xf32>
    %23 = math.exp %22 : vector<8x128xf32>
    %cst_18 = arith.constant 1.000000e+00 : f32
    %24 = vector.broadcast %cst_18 : f32 to vector<8x128xf32>
    %25 = arith.addf %24, %23 : vector<8x128xf32>
    %cst_19 = arith.constant 1.000000e+00 : f32
    %26 = vector.broadcast %cst_19 : f32 to vector<8x128xf32>
    %27 = arith.divf %26, %25 : vector<8x128xf32>
    %28 = vector.extract_strided_slice %19 {offsets = [0, 128], sizes = [8, 128], strides = [1, 1]} : vector<8x512xf32> to vector<8x128xf32>
    %cst_20 = arith.constant 0.000000e+00 : f32
    %29 = vector.broadcast %cst_20 : f32 to vector<8x128xf32>
    %30 = arith.subf %29, %28 : vector<8x128xf32>
    %31 = math.exp %30 : vector<8x128xf32>
    %cst_21 = arith.constant 1.000000e+00 : f32
    %32 = vector.broadcast %cst_21 : f32 to vector<8x128xf32>
    %33 = arith.addf %32, %31 : vector<8x128xf32>
    %cst_22 = arith.constant 1.000000e+00 : f32
    %34 = vector.broadcast %cst_22 : f32 to vector<8x128xf32>
    %35 = arith.divf %34, %33 : vector<8x128xf32>
    %36 = vector.extract_strided_slice %19 {offsets = [0, 256], sizes = [8, 128], strides = [1, 1]} : vector<8x512xf32> to vector<8x128xf32>
    %37 = math.tanh %36 : vector<8x128xf32>
    %38 = vector.extract_strided_slice %19 {offsets = [0, 384], sizes = [8, 128], strides = [1, 1]} : vector<8x512xf32> to vector<8x128xf32>
    %cst_23 = arith.constant 0.000000e+00 : f32
    %39 = vector.broadcast %cst_23 : f32 to vector<8x128xf32>
    %40 = arith.subf %39, %38 : vector<8x128xf32>
    %41 = math.exp %40 : vector<8x128xf32>
    %cst_24 = arith.constant 1.000000e+00 : f32
    %42 = vector.broadcast %cst_24 : f32 to vector<8x128xf32>
    %43 = arith.addf %42, %41 : vector<8x128xf32>
    %cst_25 = arith.constant 1.000000e+00 : f32
    %44 = vector.broadcast %cst_25 : f32 to vector<8x128xf32>
    %45 = arith.divf %44, %43 : vector<8x128xf32>
    %46 = arith.mulf %35, %11 : vector<8x128xf32>
    %47 = arith.mulf %27, %37 : vector<8x128xf32>
    %48 = arith.addf %46, %47 : vector<8x128xf32>
    %49 = math.tanh %48 : vector<8x128xf32>
    %50 = arith.mulf %45, %49 : vector<8x128xf32>
    %c1_i32 = arith.constant 1 : i32
    %c8_i32_26 = arith.constant 8 : i32
    %51 = arith.muli %c1_i32, %c8_i32_26 : i32
    %52 = tpu.assume_multiple %51, 8 : i32
    %53 = arith.index_cast %52 : i32 to index
    %c0_27 = arith.constant 0 : index
    %54 = vector.load %arg8[%53, %c0_27] : memref<64x512xf32, #tpu.memory_space<vmem>>, vector<8x512xf32>
    %55 = arith.truncf %50 : vector<8x128xf32> to vector<8x128xbf16>
    %c0_28 = arith.constant 0 : index
    %c0_29 = arith.constant 0 : index
    %56 = vector.load %arg3[%c0_28, %c0_29] : memref<128x512xbf16, #tpu.memory_space<vmem>>, vector<128x512xbf16>
    %cst_30 = arith.constant dense<0.000000e+00> : vector<8x512xf32>
    %57 = tpu.matmul %55, %56, %cst_30 {dimension_numbers = #tpu.dot_dimension_numbers<[1], [0], [0], [1], [0, 0, 1, 1], [], []>} : vector<8x128xbf16>, vector<128x512xbf16>, vector<8x512xf32> -> vector<8x512xf32>
    %58 = arith.addf %54, %57 : vector<8x512xf32>
    %59 = vector.extract_strided_slice %58 {offsets = [0, 0], sizes = [8, 128], strides = [1, 1]} : vector<8x512xf32> to vector<8x128xf32>
    %cst_31 = arith.constant 0.000000e+00 : f32
    %60 = vector.broadcast %cst_31 : f32 to vector<8x128xf32>
    %61 = arith.subf %60, %59 : vector<8x128xf32>
    %62 = math.exp %61 : vector<8x128xf32>
    %cst_32 = arith.constant 1.000000e+00 : f32
    %63 = vector.broadcast %cst_32 : f32 to vector<8x128xf32>
    %64 = arith.addf %63, %62 : vector<8x128xf32>
    %cst_33 = arith.constant 1.000000e+00 : f32
    %65 = vector.broadcast %cst_33 : f32 to vector<8x128xf32>
    %66 = arith.divf %65, %64 : vector<8x128xf32>
    %67 = vector.extract_strided_slice %58 {offsets = [0, 128], sizes = [8, 128], strides = [1, 1]} : vector<8x512xf32> to vector<8x128xf32>
    %cst_34 = arith.constant 0.000000e+00 : f32
    %68 = vector.broadcast %cst_34 : f32 to vector<8x128xf32>
    %69 = arith.subf %68, %67 : vector<8x128xf32>
    %70 = math.exp %69 : vector<8x128xf32>
    %cst_35 = arith.constant 1.000000e+00 : f32
    %71 = vector.broadcast %cst_35 : f32 to vector<8x128xf32>
    %72 = arith.addf %71, %70 : vector<8x128xf32>
    %cst_36 = arith.constant 1.000000e+00 : f32
    %73 = vector.broadcast %cst_36 : f32 to vector<8x128xf32>
    %74 = arith.divf %73, %72 : vector<8x128xf32>
    %75 = vector.extract_strided_slice %58 {offsets = [0, 256], sizes = [8, 128], strides = [1, 1]} : vector<8x512xf32> to vector<8x128xf32>
    %76 = math.tanh %75 : vector<8x128xf32>
    %77 = vector.extract_strided_slice %58 {offsets = [0, 384], sizes = [8, 128], strides = [1, 1]} : vector<8x512xf32> to vector<8x128xf32>
    %cst_37 = arith.constant 0.000000e+00 : f32
    %78 = vector.broadcast %cst_37 : f32 to vector<8x128xf32>
    %79 = arith.subf %78, %77 : vector<8x128xf32>
    %80 = math.exp %79 : vector<8x128xf32>
    %cst_38 = arith.constant 1.000000e+00 : f32
    %81 = vector.broadcast %cst_38 : f32 to vector<8x128xf32>
    %82 = arith.addf %81, %80 : vector<8x128xf32>
    %cst_39 = arith.constant 1.000000e+00 : f32
    %83 = vector.broadcast %cst_39 : f32 to vector<8x128xf32>
    %84 = arith.divf %83, %82 : vector<8x128xf32>
    %85 = arith.mulf %74, %48 : vector<8x128xf32>
    %86 = arith.mulf %66, %76 : vector<8x128xf32>
    %87 = arith.addf %85, %86 : vector<8x128xf32>
    %88 = math.tanh %87 : vector<8x128xf32>
    %89 = arith.mulf %84, %88 : vector<8x128xf32>
    %c2_i32 = arith.constant 2 : i32
    %c8_i32_40 = arith.constant 8 : i32
    %90 = arith.muli %c2_i32, %c8_i32_40 : i32
    %91 = tpu.assume_multiple %90, 8 : i32
    %92 = arith.index_cast %91 : i32 to index
    %c0_41 = arith.constant 0 : index
    %93 = vector.load %arg8[%92, %c0_41] : memref<64x512xf32, #tpu.memory_space<vmem>>, vector<8x512xf32>
    %94 = arith.truncf %89 : vector<8x128xf32> to vector<8x128xbf16>
    %c0_42 = arith.constant 0 : index
    %c0_43 = arith.constant 0 : index
    %95 = vector.load %arg3[%c0_42, %c0_43] : memref<128x512xbf16, #tpu.memory_space<vmem>>, vector<128x512xbf16>
    %cst_44 = arith.constant dense<0.000000e+00> : vector<8x512xf32>
    %96 = tpu.matmul %94, %95, %cst_44 {dimension_numbers = #tpu.dot_dimension_numbers<[1], [0], [0], [1], [0, 0, 1, 1], [], []>} : vector<8x128xbf16>, vector<128x512xbf16>, vector<8x512xf32> -> vector<8x512xf32>
    %97 = arith.addf %93, %96 : vector<8x512xf32>
    %98 = vector.extract_strided_slice %97 {offsets = [0, 0], sizes = [8, 128], strides = [1, 1]} : vector<8x512xf32> to vector<8x128xf32>
    %cst_45 = arith.constant 0.000000e+00 : f32
    %99 = vector.broadcast %cst_45 : f32 to vector<8x128xf32>
    %100 = arith.subf %99, %98 : vector<8x128xf32>
    %101 = math.exp %100 : vector<8x128xf32>
    %cst_46 = arith.constant 1.000000e+00 : f32
    %102 = vector.broadcast %cst_46 : f32 to vector<8x128xf32>
    %103 = arith.addf %102, %101 : vector<8x128xf32>
    %cst_47 = arith.constant 1.000000e+00 : f32
    %104 = vector.broadcast %cst_47 : f32 to vector<8x128xf32>
    %105 = arith.divf %104, %103 : vector<8x128xf32>
    %106 = vector.extract_strided_slice %97 {offsets = [0, 128], sizes = [8, 128], strides = [1, 1]} : vector<8x512xf32> to vector<8x128xf32>
    %cst_48 = arith.constant 0.000000e+00 : f32
    %107 = vector.broadcast %cst_48 : f32 to vector<8x128xf32>
    %108 = arith.subf %107, %106 : vector<8x128xf32>
    %109 = math.exp %108 : vector<8x128xf32>
    %cst_49 = arith.constant 1.000000e+00 : f32
    %110 = vector.broadcast %cst_49 : f32 to vector<8x128xf32>
    %111 = arith.addf %110, %109 : vector<8x128xf32>
    %cst_50 = arith.constant 1.000000e+00 : f32
    %112 = vector.broadcast %cst_50 : f32 to vector<8x128xf32>
    %113 = arith.divf %112, %111 : vector<8x128xf32>
    %114 = vector.extract_strided_slice %97 {offsets = [0, 256], sizes = [8, 128], strides = [1, 1]} : vector<8x512xf32> to vector<8x128xf32>
    %115 = math.tanh %114 : vector<8x128xf32>
    %116 = vector.extract_strided_slice %97 {offsets = [0, 384], sizes = [8, 128], strides = [1, 1]} : vector<8x512xf32> to vector<8x128xf32>
    %cst_51 = arith.constant 0.000000e+00 : f32
    %117 = vector.broadcast %cst_51 : f32 to vector<8x128xf32>
    %118 = arith.subf %117, %116 : vector<8x128xf32>
    %119 = math.exp %118 : vector<8x128xf32>
    %cst_52 = arith.constant 1.000000e+00 : f32
    %120 = vector.broadcast %cst_52 : f32 to vector<8x128xf32>
    %121 = arith.addf %120, %119 : vector<8x128xf32>
    %cst_53 = arith.constant 1.000000e+00 : f32
    %122 = vector.broadcast %cst_53 : f32 to vector<8x128xf32>
    %123 = arith.divf %122, %121 : vector<8x128xf32>
    %124 = arith.mulf %113, %87 : vector<8x128xf32>
    %125 = arith.mulf %105, %115 : vector<8x128xf32>
    %126 = arith.addf %124, %125 : vector<8x128xf32>
    %127 = math.tanh %126 : vector<8x128xf32>
    %128 = arith.mulf %123, %127 : vector<8x128xf32>
    %c3_i32 = arith.constant 3 : i32
    %c8_i32_54 = arith.constant 8 : i32
    %129 = arith.muli %c3_i32, %c8_i32_54 : i32
    %130 = tpu.assume_multiple %129, 8 : i32
    %131 = arith.index_cast %130 : i32 to index
    %c0_55 = arith.constant 0 : index
    %132 = vector.load %arg8[%131, %c0_55] : memref<64x512xf32, #tpu.memory_space<vmem>>, vector<8x512xf32>
    %133 = arith.truncf %128 : vector<8x128xf32> to vector<8x128xbf16>
    %c0_56 = arith.constant 0 : index
    %c0_57 = arith.constant 0 : index
    %134 = vector.load %arg3[%c0_56, %c0_57] : memref<128x512xbf16, #tpu.memory_space<vmem>>, vector<128x512xbf16>
    %cst_58 = arith.constant dense<0.000000e+00> : vector<8x512xf32>
    %135 = tpu.matmul %133, %134, %cst_58 {dimension_numbers = #tpu.dot_dimension_numbers<[1], [0], [0], [1], [0, 0, 1, 1], [], []>} : vector<8x128xbf16>, vector<128x512xbf16>, vector<8x512xf32> -> vector<8x512xf32>
    %136 = arith.addf %132, %135 : vector<8x512xf32>
    %137 = vector.extract_strided_slice %136 {offsets = [0, 0], sizes = [8, 128], strides = [1, 1]} : vector<8x512xf32> to vector<8x128xf32>
    %cst_59 = arith.constant 0.000000e+00 : f32
    %138 = vector.broadcast %cst_59 : f32 to vector<8x128xf32>
    %139 = arith.subf %138, %137 : vector<8x128xf32>
    %140 = math.exp %139 : vector<8x128xf32>
    %cst_60 = arith.constant 1.000000e+00 : f32
    %141 = vector.broadcast %cst_60 : f32 to vector<8x128xf32>
    %142 = arith.addf %141, %140 : vector<8x128xf32>
    %cst_61 = arith.constant 1.000000e+00 : f32
    %143 = vector.broadcast %cst_61 : f32 to vector<8x128xf32>
    %144 = arith.divf %143, %142 : vector<8x128xf32>
    %145 = vector.extract_strided_slice %136 {offsets = [0, 128], sizes = [8, 128], strides = [1, 1]} : vector<8x512xf32> to vector<8x128xf32>
    %cst_62 = arith.constant 0.000000e+00 : f32
    %146 = vector.broadcast %cst_62 : f32 to vector<8x128xf32>
    %147 = arith.subf %146, %145 : vector<8x128xf32>
    %148 = math.exp %147 : vector<8x128xf32>
    %cst_63 = arith.constant 1.000000e+00 : f32
    %149 = vector.broadcast %cst_63 : f32 to vector<8x128xf32>
    %150 = arith.addf %149, %148 : vector<8x128xf32>
    %cst_64 = arith.constant 1.000000e+00 : f32
    %151 = vector.broadcast %cst_64 : f32 to vector<8x128xf32>
    %152 = arith.divf %151, %150 : vector<8x128xf32>
    %153 = vector.extract_strided_slice %136 {offsets = [0, 256], sizes = [8, 128], strides = [1, 1]} : vector<8x512xf32> to vector<8x128xf32>
    %154 = math.tanh %153 : vector<8x128xf32>
    %155 = vector.extract_strided_slice %136 {offsets = [0, 384], sizes = [8, 128], strides = [1, 1]} : vector<8x512xf32> to vector<8x128xf32>
    %cst_65 = arith.constant 0.000000e+00 : f32
    %156 = vector.broadcast %cst_65 : f32 to vector<8x128xf32>
    %157 = arith.subf %156, %155 : vector<8x128xf32>
    %158 = math.exp %157 : vector<8x128xf32>
    %cst_66 = arith.constant 1.000000e+00 : f32
    %159 = vector.broadcast %cst_66 : f32 to vector<8x128xf32>
    %160 = arith.addf %159, %158 : vector<8x128xf32>
    %cst_67 = arith.constant 1.000000e+00 : f32
    %161 = vector.broadcast %cst_67 : f32 to vector<8x128xf32>
    %162 = arith.divf %161, %160 : vector<8x128xf32>
    %163 = arith.mulf %152, %126 : vector<8x128xf32>
    %164 = arith.mulf %144, %154 : vector<8x128xf32>
    %165 = arith.addf %163, %164 : vector<8x128xf32>
    %166 = math.tanh %165 : vector<8x128xf32>
    %167 = arith.mulf %162, %166 : vector<8x128xf32>
    %c4_i32 = arith.constant 4 : i32
    %c8_i32_68 = arith.constant 8 : i32
    %168 = arith.muli %c4_i32, %c8_i32_68 : i32
    %169 = tpu.assume_multiple %168, 8 : i32
    %170 = arith.index_cast %169 : i32 to index
    %c0_69 = arith.constant 0 : index
    %171 = vector.load %arg8[%170, %c0_69] : memref<64x512xf32, #tpu.memory_space<vmem>>, vector<8x512xf32>
    %172 = arith.truncf %167 : vector<8x128xf32> to vector<8x128xbf16>
    %c0_70 = arith.constant 0 : index
    %c0_71 = arith.constant 0 : index
    %173 = vector.load %arg3[%c0_70, %c0_71] : memref<128x512xbf16, #tpu.memory_space<vmem>>, vector<128x512xbf16>
    %cst_72 = arith.constant dense<0.000000e+00> : vector<8x512xf32>
    %174 = tpu.matmul %172, %173, %cst_72 {dimension_numbers = #tpu.dot_dimension_numbers<[1], [0], [0], [1], [0, 0, 1, 1], [], []>} : vector<8x128xbf16>, vector<128x512xbf16>, vector<8x512xf32> -> vector<8x512xf32>
    %175 = arith.addf %171, %174 : vector<8x512xf32>
    %176 = vector.extract_strided_slice %175 {offsets = [0, 0], sizes = [8, 128], strides = [1, 1]} : vector<8x512xf32> to vector<8x128xf32>
    %cst_73 = arith.constant 0.000000e+00 : f32
    %177 = vector.broadcast %cst_73 : f32 to vector<8x128xf32>
    %178 = arith.subf %177, %176 : vector<8x128xf32>
    %179 = math.exp %178 : vector<8x128xf32>
    %cst_74 = arith.constant 1.000000e+00 : f32
    %180 = vector.broadcast %cst_74 : f32 to vector<8x128xf32>
    %181 = arith.addf %180, %179 : vector<8x128xf32>
    %cst_75 = arith.constant 1.000000e+00 : f32
    %182 = vector.broadcast %cst_75 : f32 to vector<8x128xf32>
    %183 = arith.divf %182, %181 : vector<8x128xf32>
    %184 = vector.extract_strided_slice %175 {offsets = [0, 128], sizes = [8, 128], strides = [1, 1]} : vector<8x512xf32> to vector<8x128xf32>
    %cst_76 = arith.constant 0.000000e+00 : f32
    %185 = vector.broadcast %cst_76 : f32 to vector<8x128xf32>
    %186 = arith.subf %185, %184 : vector<8x128xf32>
    %187 = math.exp %186 : vector<8x128xf32>
    %cst_77 = arith.constant 1.000000e+00 : f32
    %188 = vector.broadcast %cst_77 : f32 to vector<8x128xf32>
    %189 = arith.addf %188, %187 : vector<8x128xf32>
    %cst_78 = arith.constant 1.000000e+00 : f32
    %190 = vector.broadcast %cst_78 : f32 to vector<8x128xf32>
    %191 = arith.divf %190, %189 : vector<8x128xf32>
    %192 = vector.extract_strided_slice %175 {offsets = [0, 256], sizes = [8, 128], strides = [1, 1]} : vector<8x512xf32> to vector<8x128xf32>
    %193 = math.tanh %192 : vector<8x128xf32>
    %194 = vector.extract_strided_slice %175 {offsets = [0, 384], sizes = [8, 128], strides = [1, 1]} : vector<8x512xf32> to vector<8x128xf32>
    %cst_79 = arith.constant 0.000000e+00 : f32
    %195 = vector.broadcast %cst_79 : f32 to vector<8x128xf32>
    %196 = arith.subf %195, %194 : vector<8x128xf32>
    %197 = math.exp %196 : vector<8x128xf32>
    %cst_80 = arith.constant 1.000000e+00 : f32
    %198 = vector.broadcast %cst_80 : f32 to vector<8x128xf32>
    %199 = arith.addf %198, %197 : vector<8x128xf32>
    %cst_81 = arith.constant 1.000000e+00 : f32
    %200 = vector.broadcast %cst_81 : f32 to vector<8x128xf32>
    %201 = arith.divf %200, %199 : vector<8x128xf32>
    %202 = arith.mulf %191, %165 : vector<8x128xf32>
    %203 = arith.mulf %183, %193 : vector<8x128xf32>
    %204 = arith.addf %202, %203 : vector<8x128xf32>
    %205 = math.tanh %204 : vector<8x128xf32>
    %206 = arith.mulf %201, %205 : vector<8x128xf32>
    %c5_i32 = arith.constant 5 : i32
    %c8_i32_82 = arith.constant 8 : i32
    %207 = arith.muli %c5_i32, %c8_i32_82 : i32
    %208 = tpu.assume_multiple %207, 8 : i32
    %209 = arith.index_cast %208 : i32 to index
    %c0_83 = arith.constant 0 : index
    %210 = vector.load %arg8[%209, %c0_83] : memref<64x512xf32, #tpu.memory_space<vmem>>, vector<8x512xf32>
    %211 = arith.truncf %206 : vector<8x128xf32> to vector<8x128xbf16>
    %c0_84 = arith.constant 0 : index
    %c0_85 = arith.constant 0 : index
    %212 = vector.load %arg3[%c0_84, %c0_85] : memref<128x512xbf16, #tpu.memory_space<vmem>>, vector<128x512xbf16>
    %cst_86 = arith.constant dense<0.000000e+00> : vector<8x512xf32>
    %213 = tpu.matmul %211, %212, %cst_86 {dimension_numbers = #tpu.dot_dimension_numbers<[1], [0], [0], [1], [0, 0, 1, 1], [], []>} : vector<8x128xbf16>, vector<128x512xbf16>, vector<8x512xf32> -> vector<8x512xf32>
    %214 = arith.addf %210, %213 : vector<8x512xf32>
    %215 = vector.extract_strided_slice %214 {offsets = [0, 0], sizes = [8, 128], strides = [1, 1]} : vector<8x512xf32> to vector<8x128xf32>
    %cst_87 = arith.constant 0.000000e+00 : f32
    %216 = vector.broadcast %cst_87 : f32 to vector<8x128xf32>
    %217 = arith.subf %216, %215 : vector<8x128xf32>
    %218 = math.exp %217 : vector<8x128xf32>
    %cst_88 = arith.constant 1.000000e+00 : f32
    %219 = vector.broadcast %cst_88 : f32 to vector<8x128xf32>
    %220 = arith.addf %219, %218 : vector<8x128xf32>
    %cst_89 = arith.constant 1.000000e+00 : f32
    %221 = vector.broadcast %cst_89 : f32 to vector<8x128xf32>
    %222 = arith.divf %221, %220 : vector<8x128xf32>
    %223 = vector.extract_strided_slice %214 {offsets = [0, 128], sizes = [8, 128], strides = [1, 1]} : vector<8x512xf32> to vector<8x128xf32>
    %cst_90 = arith.constant 0.000000e+00 : f32
    %224 = vector.broadcast %cst_90 : f32 to vector<8x128xf32>
    %225 = arith.subf %224, %223 : vector<8x128xf32>
    %226 = math.exp %225 : vector<8x128xf32>
    %cst_91 = arith.constant 1.000000e+00 : f32
    %227 = vector.broadcast %cst_91 : f32 to vector<8x128xf32>
    %228 = arith.addf %227, %226 : vector<8x128xf32>
    %cst_92 = arith.constant 1.000000e+00 : f32
    %229 = vector.broadcast %cst_92 : f32 to vector<8x128xf32>
    %230 = arith.divf %229, %228 : vector<8x128xf32>
    %231 = vector.extract_strided_slice %214 {offsets = [0, 256], sizes = [8, 128], strides = [1, 1]} : vector<8x512xf32> to vector<8x128xf32>
    %232 = math.tanh %231 : vector<8x128xf32>
    %233 = vector.extract_strided_slice %214 {offsets = [0, 384], sizes = [8, 128], strides = [1, 1]} : vector<8x512xf32> to vector<8x128xf32>
    %cst_93 = arith.constant 0.000000e+00 : f32
    %234 = vector.broadcast %cst_93 : f32 to vector<8x128xf32>
    %235 = arith.subf %234, %233 : vector<8x128xf32>
    %236 = math.exp %235 : vector<8x128xf32>
    %cst_94 = arith.constant 1.000000e+00 : f32
    %237 = vector.broadcast %cst_94 : f32 to vector<8x128xf32>
    %238 = arith.addf %237, %236 : vector<8x128xf32>
    %cst_95 = arith.constant 1.000000e+00 : f32
    %239 = vector.broadcast %cst_95 : f32 to vector<8x128xf32>
    %240 = arith.divf %239, %238 : vector<8x128xf32>
    %241 = arith.mulf %230, %204 : vector<8x128xf32>
    %242 = arith.mulf %222, %232 : vector<8x128xf32>
    %243 = arith.addf %241, %242 : vector<8x128xf32>
    %244 = math.tanh %243 : vector<8x128xf32>
    %245 = arith.mulf %240, %244 : vector<8x128xf32>
    %c6_i32 = arith.constant 6 : i32
    %c8_i32_96 = arith.constant 8 : i32
    %246 = arith.muli %c6_i32, %c8_i32_96 : i32
    %247 = tpu.assume_multiple %246, 8 : i32
    %248 = arith.index_cast %247 : i32 to index
    %c0_97 = arith.constant 0 : index
    %249 = vector.load %arg8[%248, %c0_97] : memref<64x512xf32, #tpu.memory_space<vmem>>, vector<8x512xf32>
    %250 = arith.truncf %245 : vector<8x128xf32> to vector<8x128xbf16>
    %c0_98 = arith.constant 0 : index
    %c0_99 = arith.constant 0 : index
    %251 = vector.load %arg3[%c0_98, %c0_99] : memref<128x512xbf16, #tpu.memory_space<vmem>>, vector<128x512xbf16>
    %cst_100 = arith.constant dense<0.000000e+00> : vector<8x512xf32>
    %252 = tpu.matmul %250, %251, %cst_100 {dimension_numbers = #tpu.dot_dimension_numbers<[1], [0], [0], [1], [0, 0, 1, 1], [], []>} : vector<8x128xbf16>, vector<128x512xbf16>, vector<8x512xf32> -> vector<8x512xf32>
    %253 = arith.addf %249, %252 : vector<8x512xf32>
    %254 = vector.extract_strided_slice %253 {offsets = [0, 0], sizes = [8, 128], strides = [1, 1]} : vector<8x512xf32> to vector<8x128xf32>
    %cst_101 = arith.constant 0.000000e+00 : f32
    %255 = vector.broadcast %cst_101 : f32 to vector<8x128xf32>
    %256 = arith.subf %255, %254 : vector<8x128xf32>
    %257 = math.exp %256 : vector<8x128xf32>
    %cst_102 = arith.constant 1.000000e+00 : f32
    %258 = vector.broadcast %cst_102 : f32 to vector<8x128xf32>
    %259 = arith.addf %258, %257 : vector<8x128xf32>
    %cst_103 = arith.constant 1.000000e+00 : f32
    %260 = vector.broadcast %cst_103 : f32 to vector<8x128xf32>
    %261 = arith.divf %260, %259 : vector<8x128xf32>
    %262 = vector.extract_strided_slice %253 {offsets = [0, 128], sizes = [8, 128], strides = [1, 1]} : vector<8x512xf32> to vector<8x128xf32>
    %cst_104 = arith.constant 0.000000e+00 : f32
    %263 = vector.broadcast %cst_104 : f32 to vector<8x128xf32>
    %264 = arith.subf %263, %262 : vector<8x128xf32>
    %265 = math.exp %264 : vector<8x128xf32>
    %cst_105 = arith.constant 1.000000e+00 : f32
    %266 = vector.broadcast %cst_105 : f32 to vector<8x128xf32>
    %267 = arith.addf %266, %265 : vector<8x128xf32>
    %cst_106 = arith.constant 1.000000e+00 : f32
    %268 = vector.broadcast %cst_106 : f32 to vector<8x128xf32>
    %269 = arith.divf %268, %267 : vector<8x128xf32>
    %270 = vector.extract_strided_slice %253 {offsets = [0, 256], sizes = [8, 128], strides = [1, 1]} : vector<8x512xf32> to vector<8x128xf32>
    %271 = math.tanh %270 : vector<8x128xf32>
    %272 = vector.extract_strided_slice %253 {offsets = [0, 384], sizes = [8, 128], strides = [1, 1]} : vector<8x512xf32> to vector<8x128xf32>
    %cst_107 = arith.constant 0.000000e+00 : f32
    %273 = vector.broadcast %cst_107 : f32 to vector<8x128xf32>
    %274 = arith.subf %273, %272 : vector<8x128xf32>
    %275 = math.exp %274 : vector<8x128xf32>
    %cst_108 = arith.constant 1.000000e+00 : f32
    %276 = vector.broadcast %cst_108 : f32 to vector<8x128xf32>
    %277 = arith.addf %276, %275 : vector<8x128xf32>
    %cst_109 = arith.constant 1.000000e+00 : f32
    %278 = vector.broadcast %cst_109 : f32 to vector<8x128xf32>
    %279 = arith.divf %278, %277 : vector<8x128xf32>
    %280 = arith.mulf %269, %243 : vector<8x128xf32>
    %281 = arith.mulf %261, %271 : vector<8x128xf32>
    %282 = arith.addf %280, %281 : vector<8x128xf32>
    %283 = math.tanh %282 : vector<8x128xf32>
    %284 = arith.mulf %279, %283 : vector<8x128xf32>
    %c7_i32 = arith.constant 7 : i32
    %c8_i32_110 = arith.constant 8 : i32
    %285 = arith.muli %c7_i32, %c8_i32_110 : i32
    %286 = tpu.assume_multiple %285, 8 : i32
    %287 = arith.index_cast %286 : i32 to index
    %c0_111 = arith.constant 0 : index
    %288 = vector.load %arg8[%287, %c0_111] : memref<64x512xf32, #tpu.memory_space<vmem>>, vector<8x512xf32>
    %289 = arith.truncf %284 : vector<8x128xf32> to vector<8x128xbf16>
    %c0_112 = arith.constant 0 : index
    %c0_113 = arith.constant 0 : index
    %290 = vector.load %arg3[%c0_112, %c0_113] : memref<128x512xbf16, #tpu.memory_space<vmem>>, vector<128x512xbf16>
    %cst_114 = arith.constant dense<0.000000e+00> : vector<8x512xf32>
    %291 = tpu.matmul %289, %290, %cst_114 {dimension_numbers = #tpu.dot_dimension_numbers<[1], [0], [0], [1], [0, 0, 1, 1], [], []>} : vector<8x128xbf16>, vector<128x512xbf16>, vector<8x512xf32> -> vector<8x512xf32>
    %292 = arith.addf %288, %291 : vector<8x512xf32>
    %293 = vector.extract_strided_slice %292 {offsets = [0, 0], sizes = [8, 128], strides = [1, 1]} : vector<8x512xf32> to vector<8x128xf32>
    %cst_115 = arith.constant 0.000000e+00 : f32
    %294 = vector.broadcast %cst_115 : f32 to vector<8x128xf32>
    %295 = arith.subf %294, %293 : vector<8x128xf32>
    %296 = math.exp %295 : vector<8x128xf32>
    %cst_116 = arith.constant 1.000000e+00 : f32
    %297 = vector.broadcast %cst_116 : f32 to vector<8x128xf32>
    %298 = arith.addf %297, %296 : vector<8x128xf32>
    %cst_117 = arith.constant 1.000000e+00 : f32
    %299 = vector.broadcast %cst_117 : f32 to vector<8x128xf32>
    %300 = arith.divf %299, %298 : vector<8x128xf32>
    %301 = vector.extract_strided_slice %292 {offsets = [0, 128], sizes = [8, 128], strides = [1, 1]} : vector<8x512xf32> to vector<8x128xf32>
    %cst_118 = arith.constant 0.000000e+00 : f32
    %302 = vector.broadcast %cst_118 : f32 to vector<8x128xf32>
    %303 = arith.subf %302, %301 : vector<8x128xf32>
    %304 = math.exp %303 : vector<8x128xf32>
    %cst_119 = arith.constant 1.000000e+00 : f32
    %305 = vector.broadcast %cst_119 : f32 to vector<8x128xf32>
    %306 = arith.addf %305, %304 : vector<8x128xf32>
    %cst_120 = arith.constant 1.000000e+00 : f32
    %307 = vector.broadcast %cst_120 : f32 to vector<8x128xf32>
    %308 = arith.divf %307, %306 : vector<8x128xf32>
    %309 = vector.extract_strided_slice %292 {offsets = [0, 256], sizes = [8, 128], strides = [1, 1]} : vector<8x512xf32> to vector<8x128xf32>
    %310 = math.tanh %309 : vector<8x128xf32>
    %311 = vector.extract_strided_slice %292 {offsets = [0, 384], sizes = [8, 128], strides = [1, 1]} : vector<8x512xf32> to vector<8x128xf32>
    %cst_121 = arith.constant 0.000000e+00 : f32
    %312 = vector.broadcast %cst_121 : f32 to vector<8x128xf32>
    %313 = arith.subf %312, %311 : vector<8x128xf32>
    %314 = math.exp %313 : vector<8x128xf32>
    %cst_122 = arith.constant 1.000000e+00 : f32
    %315 = vector.broadcast %cst_122 : f32 to vector<8x128xf32>
    %316 = arith.addf %315, %314 : vector<8x128xf32>
    %cst_123 = arith.constant 1.000000e+00 : f32
    %317 = vector.broadcast %cst_123 : f32 to vector<8x128xf32>
    %318 = arith.divf %317, %316 : vector<8x128xf32>
    %319 = arith.mulf %308, %282 : vector<8x128xf32>
    %320 = arith.mulf %300, %310 : vector<8x128xf32>
    %321 = arith.addf %319, %320 : vector<8x128xf32>
    %322 = math.tanh %321 : vector<8x128xf32>
    %323 = arith.mulf %318, %322 : vector<8x128xf32>
    %c8_i32_124 = arith.constant 8 : i32
    %c0_125 = arith.constant 0 : index
    %c0_126 = arith.constant 0 : index
    %324 = vector.load %arg9[%c0_125, %c0_126] : memref<8x128xf32, #tpu.memory_space<vmem>>, vector<8x128xf32>
    tpu.vector_store %arg9[%c0_125, %c0_126], %323 {strides = array<i32>} : memref<8x128xf32, #tpu.memory_space<vmem>>, vector<8x128xf32>,
    %c0_127 = arith.constant 0 : index
    %c0_128 = arith.constant 0 : index
    %325 = vector.load %arg10[%c0_127, %c0_128] : memref<8x128xf32, #tpu.memory_space<vmem>>, vector<8x128xf32>
    tpu.vector_store %arg10[%c0_127, %c0_128], %321 {strides = array<i32>} : memref<8x128xf32, #tpu.memory_space<vmem>>, vector<8x128xf32>,
    %c0_i32_129 = arith.constant 0 : i32
    %326 = arith.cmpi eq, %arg0, %c0_i32_129 : i32
    %327 = arith.extui %326 : i1 to i32
    %c0_i32_130 = arith.constant 0 : i32
    %328 = arith.cmpi ne, %327, %c0_i32_130 : i32
    scf.if %328 {
      %329 = arith.truncf %323 : vector<8x128xf32> to vector<8x128xbf16>
      %c0_131 = arith.constant 0 : index
      %c0_132 = arith.constant 0 : index
      %330 = vector.load %arg5[%c0_131, %c0_132] : memref<128x128xbf16, #tpu.memory_space<vmem>>, vector<128x128xbf16>
      %cst_133 = arith.constant dense<0.000000e+00> : vector<8x128xf32>
      %331 = tpu.matmul %329, %330, %cst_133 {dimension_numbers = #tpu.dot_dimension_numbers<[1], [0], [0], [1], [0, 0, 1, 1], [], []>} : vector<8x128xbf16>, vector<128x128xbf16>, vector<8x128xf32> -> vector<8x128xf32>
      %c0_134 = arith.constant 0 : index
      %c0_135 = arith.constant 0 : index
      %332 = vector.load %arg6[%c0_134, %c0_135] : memref<1x128xf32, #tpu.memory_space<vmem>>, vector<1x128xf32>
      %333 = vector.broadcast %332 : vector<1x128xf32> to vector<8x128xf32>
      %334 = arith.addf %331, %333 : vector<8x128xf32>
      %c0_136 = arith.constant 0 : index
      %c0_137 = arith.constant 0 : index
      %335 = vector.load %arg7[%c0_136, %c0_137] : memref<8x128xf32, #tpu.memory_space<vmem>>, vector<8x128xf32>
      tpu.vector_store %arg7[%c0_136, %c0_137], %334 {strides = array<i32>} : memref<8x128xf32, #tpu.memory_space<vmem>>, vector<8x128xf32>,
    } else {
    }
    return
  }
  func.func @transform_0(%arg0: i32) -> (i32, i32) {
    %c0_i32 = arith.constant 0 : i32
    %c0_i32_0 = arith.constant 0 : i32
    return %arg0, %c0_i32 : i32, i32
  }
  func.func @transform_1(%arg0: i32) -> (i32, i32) {
    %c0_i32 = arith.constant 0 : i32
    %c0_i32_0 = arith.constant 0 : i32
    %c0_i32_1 = arith.constant 0 : i32
    return %c0_i32, %c0_i32_0 : i32, i32
  }
  func.func @transform_2(%arg0: i32) -> (i32, i32) {
    %c0_i32 = arith.constant 0 : i32
    %c0_i32_0 = arith.constant 0 : i32
    %c0_i32_1 = arith.constant 0 : i32
    return %c0_i32, %c0_i32_0 : i32, i32
  }
  func.func @transform_3(%arg0: i32) -> (i32, i32) {
    %c0_i32 = arith.constant 0 : i32
    %c0_i32_0 = arith.constant 0 : i32
    %c0_i32_1 = arith.constant 0 : i32
    return %c0_i32, %c0_i32_0 : i32, i32
  }
  func.func @transform_4(%arg0: i32) -> (i32, i32) {
    %c0_i32 = arith.constant 0 : i32
    %c0_i32_0 = arith.constant 0 : i32
    %c0_i32_1 = arith.constant 0 : i32
    return %c0_i32, %c0_i32_0 : i32, i32
  }
  func.func @transform_5(%arg0: i32) -> (i32, i32) {
    %c0_i32 = arith.constant 0 : i32
    %c0_i32_0 = arith.constant 0 : i32
    %c0_i32_1 = arith.constant 0 : i32
    return %c0_i32, %c0_i32_0 : i32, i32
  }
  func.func @transform_6(%arg0: i32) -> (i32, i32) {
    %c0_i32 = arith.constant 0 : i32
    %c0_i32_0 = arith.constant 0 : i32
    %c0_i32_1 = arith.constant 0 : i32
    return %c0_i32, %c0_i32_0 : i32, i32
  }
}

</mosaic_0001>

<llo_original>
// kernel: tpu_custom_call.1
$region0: #{tpu_custom_call.1}
  #allocation0 [shape = 'u32[]', space=smem, size = 0x4, offset = 0x4, fixed_abs, tag = 'smem constant byte address 0x4 - core index']
  #allocation1 [shape = 'u32[144,128]{1,0:T(1,128)}', space=vmem, size = 0x12000, scoped, tag = 'internal scratch']
  #allocation2 [shape = 'f32[64,512]{1,0:T(8,128)}', space=vmem, size = 0x20000, scoped, tag = 'scratch operand']
  #allocation3 [shape = 'f32[8,128]{1,0:T(8,128)}', space=vmem, size = 0x1000, scoped, tag = 'scratch operand']
  #allocation4 [shape = 'f32[8,128]{1,0:T(8,128)}', space=vmem, size = 0x1000, scoped, tag = 'scratch operand']
  %s0 = inlined_call_operand.vmem [shape: bf16[64,8], index: 0, kind: input, shape index: {}]
  %s1 = inlined_call_operand.vmem [shape: bf16[8,512], index: 1, kind: input, shape index: {}]
  %s2 = inlined_call_operand.hbm [shape: bf16[128,512], index: 2, kind: input, shape index: {}]
  %s3 = inlined_call_operand.vmem [shape: f32[1,512], index: 3, kind: input, shape index: {}]
  %s4 = inlined_call_operand.hbm [shape: bf16[128,128], index: 4, kind: input, shape index: {}]
  %s5 = inlined_call_operand.vmem [shape: f32[1,128], index: 5, kind: input, shape index: {}]
  %s6 = inlined_call_operand.hbm [shape: f32[8,128], index: 6, kind: output, shape index: {}]
  %s7 = sld [smem:[#allocation0]]
  $region50: #{tpu_custom_call.1} parent=0
    _
  %s9 = ssub.s32 1, %s7
  %s10 = scalar_select 0, %s9, %s7
  $region1: #{tpu_custom_call.1} parent=0
    #allocation5 [shape = 'u8[131072]{0}', space=vmem, size = 0x20000, scoped, tag = 'input window, operand 2, single buffered']
    #allocation6 [shape = 's32[1]{0}', space=sflag, size = 0x4, scoped, tag = 'scoped memory for tpu_custom_call.1']
    #allocation7 [shape = 's32[1]{0}', space=sflag, size = 0x4, scoped, tag = 'scoped memory for tpu_custom_call.1']
    #allocation8 [shape = 'u8[32768]{0}', space=vmem, size = 0x8000, scoped, tag = 'input window, operand 4, single buffered']
    #allocation9 [shape = 's32[1]{0}', space=sflag, size = 0x4, scoped, tag = 'scoped memory for tpu_custom_call.1']
    #allocation10 [shape = 'u8[4096]{0}', space=vmem, size = 0x1000, scoped, tag = 'output window, operand 0, single buffered']
    %11 = vsyncpa [#allocation6], 0
    %12 = vsyncpa [#allocation9], 0
    %13 = vsyncpa [#allocation7], 0
    // Predicated region
    $region2: #{tpu_custom_call.1} parent=1 // pred_check
      _
    $region3: #{tpu_custom_call.1} parent=1 // pred_check_branch
      %15 = sbr.rel (0) target = $region5
    $region4: #{tpu_custom_call.1} parent=1 // pred_region
      _
    $region5: #{tpu_custom_call.1} parent=1 // pred_fallthru
      _
    // Predicated region
    $region6: #{tpu_custom_call.1} parent=1 // pred_check
      _
    $region7: #{tpu_custom_call.1} parent=1 // pred_check_branch
      %17 = sbr.rel (0) target = $region9
    $region8: #{tpu_custom_call.1} parent=1 // pred_region
      _
    $region9: #{tpu_custom_call.1} parent=1 // pred_fallthru
      _
    // Predicated region
    $region10: #{tpu_custom_call.1} parent=1 // pred_check
      _
    $region11: #{tpu_custom_call.1} parent=1 // pred_check_branch
      %19 = sbr.rel (0) target = $region13
    $region12: #{tpu_custom_call.1} parent=1 // pred_region
      %s21 = ssub.s32 4096, 4096
      %22 = vsyncadd [#allocation6], %s21
      %s23 = sshll.u32 [#allocation5], 4
      %s24 = int_to_ptr.vmem [resolvable:$true] %s23
      %29 = dma.hbm_to_vmem [thread:$0]  %s2, 4096, %s24, [#allocation6], 256, 256, 16
    $region13: #{tpu_custom_call.1} parent=1 // pred_fallthru
      _
    // Predicated region
    $region14: #{tpu_custom_call.1} parent=1 // pred_check
      _
    $region15: #{tpu_custom_call.1} parent=1 // pred_check_branch
      %31 = sbr.rel (0) target = $region17
    $region16: #{tpu_custom_call.1} parent=1 // pred_region
      _
    $region17: #{tpu_custom_call.1} parent=1 // pred_fallthru
      _
    // Predicated region
    $region18: #{tpu_custom_call.1} parent=1 // pred_check
      _
    $region19: #{tpu_custom_call.1} parent=1 // pred_check_branch
      %33 = sbr.rel (0) target = $region21
    $region20: #{tpu_custom_call.1} parent=1 // pred_region
      %s35 = ssub.s32 1024, 1024
      %36 = vsyncadd [#allocation9], %s35
      %s37 = sshll.u32 [#allocation8], 4
      %s38 = int_to_ptr.vmem [resolvable:$true] %s37
      %43 = dma.hbm_to_vmem [thread:$0]  %s4, 1024, %s38, [#allocation9], 64, 64, 4
    $region21: #{tpu_custom_call.1} parent=1 // pred_fallthru
      _
    // Predicated region
    $region22: #{tpu_custom_call.1} parent=1 // pred_check
      _
    $region23: #{tpu_custom_call.1} parent=1 // pred_check_branch
      %45 = sbr.rel (0) target = $region25
    $region24: #{tpu_custom_call.1} parent=1 // pred_region
      _
    $region25: #{tpu_custom_call.1} parent=1 // pred_fallthru
      _
    // Predicated region
    $region26: #{tpu_custom_call.1} parent=1 // pred_check
      _
    $region27: #{tpu_custom_call.1} parent=1 // pred_check_branch
      %47 = sbr.rel (0) target = $region29
    $region28: #{tpu_custom_call.1} parent=1 // pred_region
      %48 = dma.done [#allocation6], 4096
    $region29: #{tpu_custom_call.1} parent=1 // pred_fallthru
      _
    // Predicated region
    $region30: #{tpu_custom_call.1} parent=1 // pred_check
      _
    $region31: #{tpu_custom_call.1} parent=1 // pred_check_branch
      %50 = sbr.rel (0) target = $region33
    $region32: #{tpu_custom_call.1} parent=1 // pred_region
      %51 = dma.done [#allocation9], 1024
    $region33: #{tpu_custom_call.1} parent=1 // pred_fallthru
      _
    %p53 = scmp.eq.s32.totalorder 0, 0
    // Predicated region
    $region34: #{tpu_custom_call.1} parent=1 // pred_check
      %p54 = pneg %p53
    $region35: #{tpu_custom_call.1} parent=1 // pred_check_branch
      %56 = sbr.rel (%p54) target = $region37
    $region36: #{tpu_custom_call.1} parent=1 // pred_region
      %57 = vst [vmem:[#allocation3] sm:$0xff] 0.0
      %58 = vst [vmem:[#allocation4] sm:$0xff] 0.0
    $region37: #{tpu_custom_call.1} parent=1 // pred_fallthru
      _
    %v59 = vld [vmem:[%s0] sm:$0xf]
    %v60 = vld [vmem:[%s0 + $0x4] sm:$0xf]
    %v61 = vld [vmem:[%s0 + $0x8] sm:$0xf]
    %v62 = vld [vmem:[%s0 + $0xc] sm:$0xf]
    %v63 = vld [vmem:[%s0 + $0x10] sm:$0xf]
    %v64 = vld [vmem:[%s0 + $0x14] sm:$0xf]
    %v65 = vld [vmem:[%s0 + $0x18] sm:$0xf]
    %v66 = vld [vmem:[%s0 + $0x1c] sm:$0xf]
    %v67 = vld [vmem:[%s1] sm:$0xff]
    %v68 = vld [vmem:[%s1 + $0x8] sm:$0xff]
    %v69 = vld [vmem:[%s3] sm:$0xf]
    %v71 = vlaneseq
    %v72 = vshrl.u32 %v71, 7
    %v73 = vsub.s32 0, %v72
    %v74 = vrot.slane %v69, %v73
    %v75 = vlaneseq
    %v76 = vshrl.u32 %v75, 7
    %v77 = vsub.s32 1, %v76
    %v78 = vrot.slane %v69, %v77
    %v79 = vlaneseq
    %v80 = vshrl.u32 %v79, 7
    %v81 = vsub.s32 2, %v80
    %v82 = vrot.slane %v69, %v81
    %v83 = vlaneseq
    %v84 = vshrl.u32 %v83, 7
    %v85 = vsub.s32 3, %v84
    %v86 = vrot.slane %v69, %v85
    %v99 = vunpack.c.l.b16 %v59
    %v100 = vunpack.c.l.b16 %v60
    %v101 = vunpack.c.l.b16 %v61
    %v102 = vunpack.c.l.b16 %v62
    %v103 = vunpack.c.l.b16 %v63
    %v104 = vunpack.c.l.b16 %v64
    %v105 = vunpack.c.l.b16 %v65
    %v106 = vunpack.c.l.b16 %v66
    %v107 = vpack.c.b16 %v100, %v99
    %v108 = vpack.c.b16 %v102, %v101
    %v109 = vpack.c.b16 %v104, %v103
    %v110 = vpack.c.b16 %v106, %v105
    %v113 = vunpack.c.l.b16 %v67
    %v114 = vunpack.c.h.b16 %v67
    %v115 = vunpack.c.l.b16 %v68
    %v116 = vunpack.c.h.b16 %v68
    %v117 = vpack.c.b16 %v113, %v113
    %v118 = vpack.c.b16 %v114, %v114
    %v119 = vpack.c.b16 %v115, %v115
    %v120 = vpack.c.b16 %v116, %v116
    %vm121 = vcmask 64512
    %v123 = vsel %vm121, %v107, 0
    %v126 = vsel %vm121, %v108, 0
    %v129 = vsel %vm121, %v109, 0
    %v132 = vsel %vm121, %v110, 0
    %vm134 = vcmask 1043456
    %v136 = vsel %vm134, %v117, 0
    %v139 = vsel %vm134, %v118, 0
    %v142 = vsel %vm134, %v119, 0
    %v145 = vsel %vm134, %v120, 0
    %147 = vmatprep.subr.bf16.mxu0 %v139
    %148 = vmatpush1.bf16.msra.mxu0 %v136
    %149 = vmatprep.subr.bf16.mxu0 0
    %150 = vmatpush1.bf16.msra.mxu0 0
    %151 = vmatprep.subr.bf16.mxu0 0
    %152 = vmatpush1.bf16.msra.mxu0 0
    %153 = vmatprep.subr.bf16.mxu0 0
    %154 = vmatpush1.bf16.msra.mxu0 0
    %155 = vmatprep.subr.bf16.mxu0 0
    %156 = vmatpush1.bf16.msra.mxu0 0
    %157 = vmatprep.subr.bf16.mxu0 0
    %158 = vmatpush1.bf16.msra.mxu0 0
    %159 = vmatprep.subr.bf16.mxu0 0
    %160 = vmatpush1.bf16.msra.mxu0 0
    %161 = vmatprep.subr.bf16.mxu0 0
    %162 = vmatpush1.bf16.msra.mxu0 0
    %163 = vmatprep.subr.bf16.mxu0 0
    %164 = vmatpush1.bf16.msra.mxu0 0
    %165 = vmatprep.subr.bf16.mxu0 0
    %166 = vmatpush1.bf16.msra.mxu0 0
    %167 = vmatprep.subr.bf16.mxu0 0
    %168 = vmatpush1.bf16.msra.mxu0 0
    %169 = vmatprep.subr.bf16.mxu0 0
    %170 = vmatpush1.bf16.msra.mxu0 0
    %171 = vmatprep.subr.bf16.mxu0 0
    %172 = vmatpush1.bf16.msra.mxu0 0
    %173 = vmatprep.subr.bf16.mxu0 0
    %174 = vmatpush1.bf16.msra.mxu0 0
    %175 = vmatprep.subr.bf16.mxu0 0
    %176 = vmatpush1.bf16.msra.mxu0 0
    %177 = vmatprep.subr.bf16.mxu0 0
    %178 = vmatpush1.bf16.msra.mxu0 0
    %179 = vmatprep.mubr.bf16.mxu0 0
    %180 = vmatmul.mubr.bf16.gmra.mrb[0].mxu0 %v123
    %v181 = vpop.f32.mrb[0].mxu0
    %v182 = vadd.f32 %v74, %v181
    %v183 = vpop.f32.mrb[0].mxu0
    %v184 = vadd.f32 %v78, %v183
    %v185 = vpop.f32.mrb[0].mxu0
    %v186 = vadd.f32 %v74, %v185
    %v187 = vpop.f32.mrb[0].mxu0
    %v188 = vadd.f32 %v78, %v187
    %189 = vmatprep.mubr.bf16.mxu0 0
    %190 = vmatmul.mubr.bf16.gmra.mrb[0].mxu0 %v126
    %v191 = vpop.f32.mrb[0].mxu0
    %v192 = vadd.f32 %v74, %v191
    %v193 = vpop.f32.mrb[0].mxu0
    %v194 = vadd.f32 %v78, %v193
    %v195 = vpop.f32.mrb[0].mxu0
    %v196 = vadd.f32 %v74, %v195
    %v197 = vpop.f32.mrb[0].mxu0
    %v198 = vadd.f32 %v78, %v197
    %199 = vmatprep.mubr.bf16.mxu0 0
    %200 = vmatmul.mubr.bf16.gmra.mrb[0].mxu0 %v129
    %v201 = vpop.f32.mrb[0].mxu0
    %v202 = vadd.f32 %v74, %v201
    %v203 = vpop.f32.mrb[0].mxu0
    %v204 = vadd.f32 %v78, %v203
    %v205 = vpop.f32.mrb[0].mxu0
    %v206 = vadd.f32 %v74, %v205
    %v207 = vpop.f32.mrb[0].mxu0
    %v208 = vadd.f32 %v78, %v207
    %209 = vmatprep.mubr.bf16.mxu0 0
    %210 = vmatmul.mubr.bf16.gmra.mrb[0].mxu0 %v132
    %v211 = vpop.f32.mrb[0].mxu0
    %v212 = vadd.f32 %v74, %v211
    %v213 = vpop.f32.mrb[0].mxu0
    %v214 = vadd.f32 %v78, %v213
    %v215 = vpop.f32.mrb[0].mxu0
    %v216 = vadd.f32 %v74, %v215
    %v217 = vpop.f32.mrb[0].mxu0
    %v218 = vadd.f32 %v78, %v217
    %219 = vdwg.mxu0
    %220 = vmatprep.subr.bf16.mxu0 %v145
    %221 = vmatpush1.bf16.msra.mxu0 %v142
    %222 = vmatprep.subr.bf16.mxu0 0
    %223 = vmatpush1.bf16.msra.mxu0 0
    %224 = vmatprep.subr.bf16.mxu0 0
    %225 = vmatpush1.bf16.msra.mxu0 0
    %226 = vmatprep.subr.bf16.mxu0 0
    %227 = vmatpush1.bf16.msra.mxu0 0
    %228 = vmatprep.subr.bf16.mxu0 0
    %229 = vmatpush1.bf16.msra.mxu0 0
    %230 = vmatprep.subr.bf16.mxu0 0
    %231 = vmatpush1.bf16.msra.mxu0 0
    %232 = vmatprep.subr.bf16.mxu0 0
    %233 = vmatpush1.bf16.msra.mxu0 0
    %234 = vmatprep.subr.bf16.mxu0 0
    %235 = vmatpush1.bf16.msra.mxu0 0
    %236 = vmatprep.subr.bf16.mxu0 0
    %237 = vmatpush1.bf16.msra.mxu0 0
    %238 = vmatprep.subr.bf16.mxu0 0
    %239 = vmatpush1.bf16.msra.mxu0 0
    %240 = vmatprep.subr.bf16.mxu0 0
    %241 = vmatpush1.bf16.msra.mxu0 0
    %242 = vmatprep.subr.bf16.mxu0 0
    %243 = vmatpush1.bf16.msra.mxu0 0
    %244 = vmatprep.subr.bf16.mxu0 0
    %245 = vmatpush1.bf16.msra.mxu0 0
    %246 = vmatprep.subr.bf16.mxu0 0
    %247 = vmatpush1.bf16.msra.mxu0 0
    %248 = vmatprep.subr.bf16.mxu0 0
    %249 = vmatpush1.bf16.msra.mxu0 0
    %250 = vmatprep.subr.bf16.mxu0 0
    %251 = vmatpush1.bf16.msra.mxu0 0
    %252 = vmatprep.mubr.bf16.mxu0 0
    %253 = vmatmul.mubr.bf16.gmra.mrb[0].mxu0 %v123
    %v254 = vpop.f32.mrb[0].mxu0
    %v255 = vadd.f32 %v82, %v254
    %v256 = vpop.f32.mrb[0].mxu0
    %v257 = vadd.f32 %v86, %v256
    %v258 = vpop.f32.mrb[0].mxu0
    %v259 = vadd.f32 %v82, %v258
    %v260 = vpop.f32.mrb[0].mxu0
    %v261 = vadd.f32 %v86, %v260
    %262 = vmatprep.mubr.bf16.mxu0 0
    %263 = vmatmul.mubr.bf16.gmra.mrb[0].mxu0 %v126
    %v264 = vpop.f32.mrb[0].mxu0
    %v265 = vadd.f32 %v82, %v264
    %v266 = vpop.f32.mrb[0].mxu0
    %v267 = vadd.f32 %v86, %v266
    %v268 = vpop.f32.mrb[0].mxu0
    %v269 = vadd.f32 %v82, %v268
    %v270 = vpop.f32.mrb[0].mxu0
    %v271 = vadd.f32 %v86, %v270
    %272 = vmatprep.mubr.bf16.mxu0 0
    %273 = vmatmul.mubr.bf16.gmra.mrb[0].mxu0 %v129
    %v274 = vpop.f32.mrb[0].mxu0
    %v275 = vadd.f32 %v82, %v274
    %v276 = vpop.f32.mrb[0].mxu0
    %v277 = vadd.f32 %v86, %v276
    %v278 = vpop.f32.mrb[0].mxu0
    %v279 = vadd.f32 %v82, %v278
    %v280 = vpop.f32.mrb[0].mxu0
    %v281 = vadd.f32 %v86, %v280
    %282 = vmatprep.mubr.bf16.mxu0 0
    %283 = vmatmul.mubr.bf16.gmra.mrb[0].mxu0 %v132
    %v284 = vpop.f32.mrb[0].mxu0
    %v285 = vadd.f32 %v82, %v284
    %v286 = vpop.f32.mrb[0].mxu0
    %v287 = vadd.f32 %v86, %v286
    %v288 = vpop.f32.mrb[0].mxu0
    %v289 = vadd.f32 %v82, %v288
    %v290 = vpop.f32.mrb[0].mxu0
    %v291 = vadd.f32 %v86, %v290
    %292 = vdwg.mxu0
    %293 = vst [vmem:[#allocation2] sm:$0xff] %v182
    %294 = vst [vmem:[#allocation2 + $0x8] sm:$0xff] %v184
    %295 = vst [vmem:[#allocation2 + $0x10] sm:$0xff] %v255
    %296 = vst [vmem:[#allocation2 + $0x18] sm:$0xff] %v257
    %297 = vst [vmem:[#allocation2 + $0x20] sm:$0xff] %v186
    %298 = vst [vmem:[#allocation2 + $0x28] sm:$0xff] %v188
    %299 = vst [vmem:[#allocation2 + $0x30] sm:$0xff] %v259
    %300 = vst [vmem:[#allocation2 + $0x38] sm:$0xff] %v261
    %301 = vst [vmem:[#allocation2 + $0x40] sm:$0xff] %v192
    %302 = vst [vmem:[#allocation2 + $0x48] sm:$0xff] %v194
    %303 = vst [vmem:[#allocation2 + $0x50] sm:$0xff] %v265
    %304 = vst [vmem:[#allocation2 + $0x58] sm:$0xff] %v267
    %305 = vst [vmem:[#allocation2 + $0x60] sm:$0xff] %v196
    %306 = vst [vmem:[#allocation2 + $0x68] sm:$0xff] %v198
    %307 = vst [vmem:[#allocation2 + $0x70] sm:$0xff] %v269
    %308 = vst [vmem:[#allocation2 + $0x78] sm:$0xff] %v271
    %309 = vst [vmem:[#allocation2 + $0x80] sm:$0xff] %v202
    %310 = vst [vmem:[#allocation2 + $0x88] sm:$0xff] %v204
    %311 = vst [vmem:[#allocation2 + $0x90] sm:$0xff] %v275
    %312 = vst [vmem:[#allocation2 + $0x98] sm:$0xff] %v277
    %313 = vst [vmem:[#allocation2 + $0xa0] sm:$0xff] %v206
    %314 = vst [vmem:[#allocation2 + $0xa8] sm:$0xff] %v208
    %315 = vst [vmem:[#allocation2 + $0xb0] sm:$0xff] %v279
    %316 = vst [vmem:[#allocation2 + $0xb8] sm:$0xff] %v281
    %317 = vst [vmem:[#allocation2 + $0xc0] sm:$0xff] %v212
    %318 = vst [vmem:[#allocation2 + $0xc8] sm:$0xff] %v214
    %319 = vst [vmem:[#allocation2 + $0xd0] sm:$0xff] %v285
    %320 = vst [vmem:[#allocation2 + $0xd8] sm:$0xff] %v287
    %321 = vst [vmem:[#allocation2 + $0xe0] sm:$0xff] %v216
    %322 = vst [vmem:[#allocation2 + $0xe8] sm:$0xff] %v218
    %323 = vst [vmem:[#allocation2 + $0xf0] sm:$0xff] %v289
    %324 = vst [vmem:[#allocation2 + $0xf8] sm:$0xff] %v291
    %v325 = vld [vmem:[#allocation3] sm:$0xff]
    %v326 = vld [vmem:[#allocation4] sm:$0xff]
    %s327 = smul.u32 0, 4
    %s328 = smul.addr %s327, 8
    %s329 = scalar_lea.vmem [#allocation2], %s328
    %v330 = vld [vmem:[%s329] sm:$0xff]
    %v331 = vld [vmem:[%s329 + $0x8] sm:$0xff]
    %v332 = vld [vmem:[%s329 + $0x10] sm:$0xff]
    %v333 = vld [vmem:[%s329 + $0x18] sm:$0xff]
    %v334 = vpack.c.bf16 %v325, %v325
    %v335 = vld [vmem:[#allocation5] sm:$0xff]
    %v336 = vld [vmem:[#allocation5 + $0x8] sm:$0xff]
    %v337 = vld [vmem:[#allocation5 + $0x10] sm:$0xff]
    %v338 = vld [vmem:[#allocation5 + $0x18] sm:$0xff]
    %v339 = vld [vmem:[#allocation5 + $0x20] sm:$0xff]
    %v340 = vld [vmem:[#allocation5 + $0x28] sm:$0xff]
    %v341 = vld [vmem:[#allocation5 + $0x30] sm:$0xff]
    %v342 = vld [vmem:[#allocation5 + $0x38] sm:$0xff]
    %v343 = vld [vmem:[#allocation5 + $0x40] sm:$0xff]
    %v344 = vld [vmem:[#allocation5 + $0x48] sm:$0xff]
    %v345 = vld [vmem:[#allocation5 + $0x50] sm:$0xff]
    %v346 = vld [vmem:[#allocation5 + $0x58] sm:$0xff]
    %v347 = vld [vmem:[#allocation5 + $0x60] sm:$0xff]
    %v348 = vld [vmem:[#allocation5 + $0x68] sm:$0xff]
    %v349 = vld [vmem:[#allocation5 + $0x70] sm:$0xff]
    %v350 = vld [vmem:[#allocation5 + $0x78] sm:$0xff]
    %v351 = vld [vmem:[#allocation5 + $0x80] sm:$0xff]
    %v352 = vld [vmem:[#allocation5 + $0x88] sm:$0xff]
    %v353 = vld [vmem:[#allocation5 + $0x90] sm:$0xff]
    %v354 = vld [vmem:[#allocation5 + $0x98] sm:$0xff]
    %v355 = vld [vmem:[#allocation5 + $0xa0] sm:$0xff]
    %v356 = vld [vmem:[#allocation5 + $0xa8] sm:$0xff]
    %v357 = vld [vmem:[#allocation5 + $0xb0] sm:$0xff]
    %v358 = vld [vmem:[#allocation5 + $0xb8] sm:$0xff]
    %v359 = vld [vmem:[#allocation5 + $0xc0] sm:$0xff]
    %v360 = vld [vmem:[#allocation5 + $0xc8] sm:$0xff]
    %v361 = vld [vmem:[#allocation5 + $0xd0] sm:$0xff]
    %v362 = vld [vmem:[#allocation5 + $0xd8] sm:$0xff]
    %v363 = vld [vmem:[#allocation5 + $0xe0] sm:$0xff]
    %v364 = vld [vmem:[#allocation5 + $0xe8] sm:$0xff]
    %v365 = vld [vmem:[#allocation5 + $0xf0] sm:$0xff]
    %v366 = vld [vmem:[#allocation5 + $0xf8] sm:$0xff]
    %v399 = vunpack.c.l.b16 %v335
    %v400 = vunpack.c.h.b16 %v335
    %v401 = vunpack.c.l.b16 %v336
    %v402 = vunpack.c.h.b16 %v336
    %v403 = vunpack.c.l.b16 %v337
    %v404 = vunpack.c.h.b16 %v337
    %v405 = vunpack.c.l.b16 %v338
    %v406 = vunpack.c.h.b16 %v338
    %v407 = vunpack.c.l.b16 %v339
    %v408 = vunpack.c.h.b16 %v339
    %v409 = vunpack.c.l.b16 %v340
    %v410 = vunpack.c.h.b16 %v340
    %v411 = vunpack.c.l.b16 %v341
    %v412 = vunpack.c.h.b16 %v341
    %v413 = vunpack.c.l.b16 %v342
    %v414 = vunpack.c.h.b16 %v342
    %v415 = vunpack.c.l.b16 %v343
    %v416 = vunpack.c.h.b16 %v343
    %v417 = vunpack.c.l.b16 %v344
    %v418 = vunpack.c.h.b16 %v344
    %v419 = vunpack.c.l.b16 %v345
    %v420 = vunpack.c.h.b16 %v345
    %v421 = vunpack.c.l.b16 %v346
    %v422 = vunpack.c.h.b16 %v346
    %v423 = vunpack.c.l.b16 %v347
    %v424 = vunpack.c.h.b16 %v347
    %v425 = vunpack.c.l.b16 %v348
    %v426 = vunpack.c.h.b16 %v348
    %v427 = vunpack.c.l.b16 %v349
    %v428 = vunpack.c.h.b16 %v349
    %v429 = vunpack.c.l.b16 %v350
    %v430 = vunpack.c.h.b16 %v350
    %v431 = vunpack.c.l.b16 %v351
    %v432 = vunpack.c.h.b16 %v351
    %v433 = vunpack.c.l.b16 %v352
    %v434 = vunpack.c.h.b16 %v352
    %v435 = vunpack.c.l.b16 %v353
    %v436 = vunpack.c.h.b16 %v353
    %v437 = vunpack.c.l.b16 %v354
    %v438 = vunpack.c.h.b16 %v354
    %v439 = vunpack.c.l.b16 %v355
    %v440 = vunpack.c.h.b16 %v355
    %v441 = vunpack.c.l.b16 %v356
    %v442 = vunpack.c.h.b16 %v356
    %v443 = vunpack.c.l.b16 %v357
    %v444 = vunpack.c.h.b16 %v357
    %v445 = vunpack.c.l.b16 %v358
    %v446 = vunpack.c.h.b16 %v358
    %v447 = vunpack.c.l.b16 %v359
    %v448 = vunpack.c.h.b16 %v359
    %v449 = vunpack.c.l.b16 %v360
    %v450 = vunpack.c.h.b16 %v360
    %v451 = vunpack.c.l.b16 %v361
    %v452 = vunpack.c.h.b16 %v361
    %v453 = vunpack.c.l.b16 %v362
    %v454 = vunpack.c.h.b16 %v362
    %v455 = vunpack.c.l.b16 %v363
    %v456 = vunpack.c.h.b16 %v363
    %v457 = vunpack.c.l.b16 %v364
    %v458 = vunpack.c.h.b16 %v364
    %v459 = vunpack.c.l.b16 %v365
    %v460 = vunpack.c.h.b16 %v365
    %v461 = vunpack.c.l.b16 %v366
    %v462 = vunpack.c.h.b16 %v366
    %v463 = vpack.c.b16 %v403, %v399
    %v464 = vpack.c.b16 %v404, %v400
    %v465 = vpack.c.b16 %v405, %v401
    %v466 = vpack.c.b16 %v406, %v402
    %v467 = vpack.c.b16 %v411, %v407
    %v468 = vpack.c.b16 %v412, %v408
    %v469 = vpack.c.b16 %v413, %v409
    %v470 = vpack.c.b16 %v414, %v410
    %v471 = vpack.c.b16 %v419, %v415
    %v472 = vpack.c.b16 %v420, %v416
    %v473 = vpack.c.b16 %v421, %v417
    %v474 = vpack.c.b16 %v422, %v418
    %v475 = vpack.c.b16 %v427, %v423
    %v476 = vpack.c.b16 %v428, %v424
    %v477 = vpack.c.b16 %v429, %v425
    %v478 = vpack.c.b16 %v430, %v426
    %v479 = vpack.c.b16 %v435, %v431
    %v480 = vpack.c.b16 %v436, %v432
    %v481 = vpack.c.b16 %v437, %v433
    %v482 = vpack.c.b16 %v438, %v434
    %v483 = vpack.c.b16 %v443, %v439
    %v484 = vpack.c.b16 %v444, %v440
    %v485 = vpack.c.b16 %v445, %v441
    %v486 = vpack.c.b16 %v446, %v442
    %v487 = vpack.c.b16 %v451, %v447
    %v488 = vpack.c.b16 %v452, %v448
    %v489 = vpack.c.b16 %v453, %v449
    %v490 = vpack.c.b16 %v454, %v450
    %v491 = vpack.c.b16 %v459, %v455
    %v492 = vpack.c.b16 %v460, %v456
    %v493 = vpack.c.b16 %v461, %v457
    %v494 = vpack.c.b16 %v462, %v458
    %527 = vmatprep.subr.bf16.mxu0 %v464
    %528 = vmatpush1.bf16.msra.mxu0 %v463
    %529 = vmatprep.subr.bf16.mxu0 %v468
    %530 = vmatpush1.bf16.msra.mxu0 %v467
    %531 = vmatprep.subr.bf16.mxu0 %v472
    %532 = vmatpush1.bf16.msra.mxu0 %v471
    %533 = vmatprep.subr.bf16.mxu0 %v476
    %534 = vmatpush1.bf16.msra.mxu0 %v475
    %535 = vmatprep.subr.bf16.mxu0 %v480
    %536 = vmatpush1.bf16.msra.mxu0 %v479
    %537 = vmatprep.subr.bf16.mxu0 %v484
    %538 = vmatpush1.bf16.msra.mxu0 %v483
    %539 = vmatprep.subr.bf16.mxu0 %v488
    %540 = vmatpush1.bf16.msra.mxu0 %v487
    %541 = vmatprep.subr.bf16.mxu0 %v492
    %542 = vmatpush1.bf16.msra.mxu0 %v491
    %543 = vmatprep.subr.bf16.mxu0 0
    %544 = vmatpush1.bf16.msra.mxu0 0
    %545 = vmatprep.subr.bf16.mxu0 0
    %546 = vmatpush1.bf16.msra.mxu0 0
    %547 = vmatprep.subr.bf16.mxu0 0
    %548 = vmatpush1.bf16.msra.mxu0 0
    %549 = vmatprep.subr.bf16.mxu0 0
    %550 = vmatpush1.bf16.msra.mxu0 0
    %551 = vmatprep.subr.bf16.mxu0 0
    %552 = vmatpush1.bf16.msra.mxu0 0
    %553 = vmatprep.subr.bf16.mxu0 0
    %554 = vmatpush1.bf16.msra.mxu0 0
    %555 = vmatprep.subr.bf16.mxu0 0
    %556 = vmatpush1.bf16.msra.mxu0 0
    %557 = vmatprep.subr.bf16.mxu0 0
    %558 = vmatpush1.bf16.msra.mxu0 0
    %559 = vmatprep.mubr.bf16.mxu0 0
    %560 = vmatmul.mubr.bf16.gmra.mrb[0].mxu0 %v334
    %v561 = vpop.f32.mrb[0].mxu0
    %v562 = vadd.f32 0.0, %v561
    %v563 = vpop.f32.mrb[0].mxu0
    %v564 = vadd.f32 0.0, %v563
    %v565 = vpop.f32.mrb[0].mxu0
    %v566 = vpop.f32.mrb[0].mxu0
    %567 = vdwg.mxu0
    %568 = vmatprep.subr.bf16.mxu0 %v466
    %569 = vmatpush1.bf16.msra.mxu0 %v465
    %570 = vmatprep.subr.bf16.mxu0 %v470
    %571 = vmatpush1.bf16.msra.mxu0 %v469
    %572 = vmatprep.subr.bf16.mxu0 %v474
    %573 = vmatpush1.bf16.msra.mxu0 %v473
    %574 = vmatprep.subr.bf16.mxu0 %v478
    %575 = vmatpush1.bf16.msra.mxu0 %v477
    %576 = vmatprep.subr.bf16.mxu0 %v482
    %577 = vmatpush1.bf16.msra.mxu0 %v481
    %578 = vmatprep.subr.bf16.mxu0 %v486
    %579 = vmatpush1.bf16.msra.mxu0 %v485
    %580 = vmatprep.subr.bf16.mxu0 %v490
    %581 = vmatpush1.bf16.msra.mxu0 %v489
    %582 = vmatprep.subr.bf16.mxu0 %v494
    %583 = vmatpush1.bf16.msra.mxu0 %v493
    %584 = vmatprep.subr.bf16.mxu0 0
    %585 = vmatpush1.bf16.msra.mxu0 0
    %586 = vmatprep.subr.bf16.mxu0 0
    %587 = vmatpush1.bf16.msra.mxu0 0
    %588 = vmatprep.subr.bf16.mxu0 0
    %589 = vmatpush1.bf16.msra.mxu0 0
    %590 = vmatprep.subr.bf16.mxu0 0
    %591 = vmatpush1.bf16.msra.mxu0 0
    %592 = vmatprep.subr.bf16.mxu0 0
    %593 = vmatpush1.bf16.msra.mxu0 0
    %594 = vmatprep.subr.bf16.mxu0 0
    %595 = vmatpush1.bf16.msra.mxu0 0
    %596 = vmatprep.subr.bf16.mxu0 0
    %597 = vmatpush1.bf16.msra.mxu0 0
    %598 = vmatprep.subr.bf16.mxu0 0
    %599 = vmatpush1.bf16.msra.mxu0 0
    %600 = vmatprep.mubr.bf16.mxu0 0
    %601 = vmatmul.mubr.bf16.gmra.mrb[0].mxu0 %v334
    %v602 = vpop.f32.mrb[0].mxu0
    %v603 = vadd.f32 0.0, %v602
    %v604 = vpop.f32.mrb[0].mxu0
    %v605 = vadd.f32 0.0, %v604
    %v606 = vpop.f32.mrb[0].mxu0
    %v607 = vpop.f32.mrb[0].mxu0
    %608 = vdwg.mxu0
    %v609 = vadd.f32 %v330, %v562
    %v610 = vadd.f32 %v331, %v564
    %v611 = vadd.f32 %v332, %v603
    %v612 = vadd.f32 %v333, %v605
    %v613 = vsub.f32 0.0, %v609
    %v614 = vmul.f32 %v613, 1.442695
    %v615 = vpow.pop %v614
    %v616 = vadd.f32 %v615, 1.0
    %v617 = vrcp.pop %v616
    %v618 = vmul.f32 1.0, %v617
    %v619 = vsub.f32 0.0, %v610
    %v620 = vmul.f32 %v619, 1.442695
    %v621 = vpow.pop %v620
    %v622 = vadd.f32 %v621, 1.0
    %v623 = vrcp.pop %v622
    %v624 = vmul.f32 1.0, %v623
    %v625 = vtanh.pop %v611
    %v626 = vsub.f32 0.0, %v612
    %v627 = vmul.f32 %v626, 1.442695
    %v628 = vpow.pop %v627
    %v629 = vadd.f32 %v628, 1.0
    %v630 = vrcp.pop %v629
    %v631 = vmul.f32 1.0, %v630
    %v632 = vmul.f32 %v624, %v326
    %v633 = vmul.f32 %v618, %v625
    %v634 = vadd.f32 %v632, %v633
    %v635 = vtanh.pop %v634
    %v636 = vmul.f32 %v631, %v635
    %s637 = smul.u32 1, 4
    %s638 = smul.addr %s637, 8
    %s639 = scalar_lea.vmem [#allocation2], %s638
    %v640 = vld [vmem:[%s639] sm:$0xff]
    %v641 = vld [vmem:[%s639 + $0x8] sm:$0xff]
    %v642 = vld [vmem:[%s639 + $0x10] sm:$0xff]
    %v643 = vld [vmem:[%s639 + $0x18] sm:$0xff]
    %v644 = vpack.c.bf16 %v636, %v636
    %645 = vmatprep.subr.bf16.mxu0 %v464
    %646 = vmatpush1.bf16.msra.mxu0 %v463
    %647 = vmatprep.subr.bf16.mxu0 %v468
    %648 = vmatpush1.bf16.msra.mxu0 %v467
    %649 = vmatprep.subr.bf16.mxu0 %v472
    %650 = vmatpush1.bf16.msra.mxu0 %v471
    %651 = vmatprep.subr.bf16.mxu0 %v476
    %652 = vmatpush1.bf16.msra.mxu0 %v475
    %653 = vmatprep.subr.bf16.mxu0 %v480
    %654 = vmatpush1.bf16.msra.mxu0 %v479
    %655 = vmatprep.subr.bf16.mxu0 %v484
    %656 = vmatpush1.bf16.msra.mxu0 %v483
    %657 = vmatprep.subr.bf16.mxu0 %v488
    %658 = vmatpush1.bf16.msra.mxu0 %v487
    %659 = vmatprep.subr.bf16.mxu0 %v492
    %660 = vmatpush1.bf16.msra.mxu0 %v491
    %661 = vmatprep.subr.bf16.mxu0 0
    %662 = vmatpush1.bf16.msra.mxu0 0
    %663 = vmatprep.subr.bf16.mxu0 0
    %664 = vmatpush1.bf16.msra.mxu0 0
    %665 = vmatprep.subr.bf16.mxu0 0
    %666 = vmatpush1.bf16.msra.mxu0 0
    %667 = vmatprep.subr.bf16.mxu0 0
    %668 = vmatpush1.bf16.msra.mxu0 0
    %669 = vmatprep.subr.bf16.mxu0 0
    %670 = vmatpush1.bf16.msra.mxu0 0
    %671 = vmatprep.subr.bf16.mxu0 0
    %672 = vmatpush1.bf16.msra.mxu0 0
    %673 = vmatprep.subr.bf16.mxu0 0
    %674 = vmatpush1.bf16.msra.mxu0 0
    %675 = vmatprep.subr.bf16.mxu0 0
    %676 = vmatpush1.bf16.msra.mxu0 0
    %677 = vmatprep.mubr.bf16.mxu0 0
    %678 = vmatmul.mubr.bf16.gmra.mrb[0].mxu0 %v644
    %v679 = vpop.f32.mrb[0].mxu0
    %v680 = vadd.f32 0.0, %v679
    %v681 = vpop.f32.mrb[0].mxu0
    %v682 = vadd.f32 0.0, %v681
    %v683 = vpop.f32.mrb[0].mxu0
    %v684 = vpop.f32.mrb[0].mxu0
    %685 = vdwg.mxu0
    %686 = vmatprep.subr.bf16.mxu0 %v466
    %687 = vmatpush1.bf16.msra.mxu0 %v465
    %688 = vmatprep.subr.bf16.mxu0 %v470
    %689 = vmatpush1.bf16.msra.mxu0 %v469
    %690 = vmatprep.subr.bf16.mxu0 %v474
    %691 = vmatpush1.bf16.msra.mxu0 %v473
    %692 = vmatprep.subr.bf16.mxu0 %v478
    %693 = vmatpush1.bf16.msra.mxu0 %v477
    %694 = vmatprep.subr.bf16.mxu0 %v482
    %695 = vmatpush1.bf16.msra.mxu0 %v481
    %696 = vmatprep.subr.bf16.mxu0 %v486
    %697 = vmatpush1.bf16.msra.mxu0 %v485
    %698 = vmatprep.subr.bf16.mxu0 %v490
    %699 = vmatpush1.bf16.msra.mxu0 %v489
    %700 = vmatprep.subr.bf16.mxu0 %v494
    %701 = vmatpush1.bf16.msra.mxu0 %v493
    %702 = vmatprep.subr.bf16.mxu0 0
    %703 = vmatpush1.bf16.msra.mxu0 0
    %704 = vmatprep.subr.bf16.mxu0 0
    %705 = vmatpush1.bf16.msra.mxu0 0
    %706 = vmatprep.subr.bf16.mxu0 0
    %707 = vmatpush1.bf16.msra.mxu0 0
    %708 = vmatprep.subr.bf16.mxu0 0
    %709 = vmatpush1.bf16.msra.mxu0 0
    %710 = vmatprep.subr.bf16.mxu0 0
    %711 = vmatpush1.bf16.msra.mxu0 0
    %712 = vmatprep.subr.bf16.mxu0 0
    %713 = vmatpush1.bf16.msra.mxu0 0
    %714 = vmatprep.subr.bf16.mxu0 0
    %715 = vmatpush1.bf16.msra.mxu0 0
    %716 = vmatprep.subr.bf16.mxu0 0
    %717 = vmatpush1.bf16.msra.mxu0 0
    %718 = vmatprep.mubr.bf16.mxu0 0
    %719 = vmatmul.mubr.bf16.gmra.mrb[0].mxu0 %v644
    %v720 = vpop.f32.mrb[0].mxu0
    %v721 = vadd.f32 0.0, %v720
    %v722 = vpop.f32.mrb[0].mxu0
    %v723 = vadd.f32 0.0, %v722
    %v724 = vpop.f32.mrb[0].mxu0
    %v725 = vpop.f32.mrb[0].mxu0
    %726 = vdwg.mxu0
    %v727 = vadd.f32 %v640, %v680
    %v728 = vadd.f32 %v641, %v682
    %v729 = vadd.f32 %v642, %v721
    %v730 = vadd.f32 %v643, %v723
    %v731 = vsub.f32 0.0, %v727
    %v732 = vmul.f32 %v731, 1.442695
    %v733 = vpow.pop %v732
    %v734 = vadd.f32 %v733, 1.0
    %v735 = vrcp.pop %v734
    %v736 = vmul.f32 1.0, %v735
    %v737 = vsub.f32 0.0, %v728
    %v738 = vmul.f32 %v737, 1.442695
    %v739 = vpow.pop %v738
    %v740 = vadd.f32 %v739, 1.0
    %v741 = vrcp.pop %v740
    %v742 = vmul.f32 1.0, %v741
    %v743 = vtanh.pop %v729
    %v744 = vsub.f32 0.0, %v730
    %v745 = vmul.f32 %v744, 1.442695
    %v746 = vpow.pop %v745
    %v747 = vadd.f32 %v746, 1.0
    %v748 = vrcp.pop %v747
    %v749 = vmul.f32 1.0, %v748
    %v750 = vmul.f32 %v742, %v634
    %v751 = vmul.f32 %v736, %v743
    %v752 = vadd.f32 %v750, %v751
    %v753 = vtanh.pop %v752
    %v754 = vmul.f32 %v749, %v753
    %s755 = smul.u32 2, 4
    %s756 = smul.addr %s755, 8
    %s757 = scalar_lea.vmem [#allocation2], %s756
    %v758 = vld [vmem:[%s757] sm:$0xff]
    %v759 = vld [vmem:[%s757 + $0x8] sm:$0xff]
    %v760 = vld [vmem:[%s757 + $0x10] sm:$0xff]
    %v761 = vld [vmem:[%s757 + $0x18] sm:$0xff]
    %v762 = vpack.c.bf16 %v754, %v754
    %763 = vmatprep.subr.bf16.mxu0 %v464
    %764 = vmatpush1.bf16.msra.mxu0 %v463
    %765 = vmatprep.subr.bf16.mxu0 %v468
    %766 = vmatpush1.bf16.msra.mxu0 %v467
    %767 = vmatprep.subr.bf16.mxu0 %v472
    %768 = vmatpush1.bf16.msra.mxu0 %v471
    %769 = vmatprep.subr.bf16.mxu0 %v476
    %770 = vmatpush1.bf16.msra.mxu0 %v475
    %771 = vmatprep.subr.bf16.mxu0 %v480
    %772 = vmatpush1.bf16.msra.mxu0 %v479
    %773 = vmatprep.subr.bf16.mxu0 %v484
    %774 = vmatpush1.bf16.msra.mxu0 %v483
    %775 = vmatprep.subr.bf16.mxu0 %v488
    %776 = vmatpush1.bf16.msra.mxu0 %v487
    %777 = vmatprep.subr.bf16.mxu0 %v492
    %778 = vmatpush1.bf16.msra.mxu0 %v491
    %779 = vmatprep.subr.bf16.mxu0 0
    %780 = vmatpush1.bf16.msra.mxu0 0
    %781 = vmatprep.subr.bf16.mxu0 0
    %782 = vmatpush1.bf16.msra.mxu0 0
    %783 = vmatprep.subr.bf16.mxu0 0
    %784 = vmatpush1.bf16.msra.mxu0 0
    %785 = vmatprep.subr.bf16.mxu0 0
    %786 = vmatpush1.bf16.msra.mxu0 0
    %787 = vmatprep.subr.bf16.mxu0 0
    %788 = vmatpush1.bf16.msra.mxu0 0
    %789 = vmatprep.subr.bf16.mxu0 0
    %790 = vmatpush1.bf16.msra.mxu0 0
    %791 = vmatprep.subr.bf16.mxu0 0
    %792 = vmatpush1.bf16.msra.mxu0 0
    %793 = vmatprep.subr.bf16.mxu0 0
    %794 = vmatpush1.bf16.msra.mxu0 0
    %795 = vmatprep.mubr.bf16.mxu0 0
    %796 = vmatmul.mubr.bf16.gmra.mrb[0].mxu0 %v762
    %v797 = vpop.f32.mrb[0].mxu0
    %v798 = vadd.f32 0.0, %v797
    %v799 = vpop.f32.mrb[0].mxu0
    %v800 = vadd.f32 0.0, %v799
    %v801 = vpop.f32.mrb[0].mxu0
    %v802 = vpop.f32.mrb[0].mxu0
    %803 = vdwg.mxu0
    %804 = vmatprep.subr.bf16.mxu0 %v466
    %805 = vmatpush1.bf16.msra.mxu0 %v465
    %806 = vmatprep.subr.bf16.mxu0 %v470
    %807 = vmatpush1.bf16.msra.mxu0 %v469
    %808 = vmatprep.subr.bf16.mxu0 %v474
    %809 = vmatpush1.bf16.msra.mxu0 %v473
    %810 = vmatprep.subr.bf16.mxu0 %v478
    %811 = vmatpush1.bf16.msra.mxu0 %v477
    %812 = vmatprep.subr.bf16.mxu0 %v482
    %813 = vmatpush1.bf16.msra.mxu0 %v481
    %814 = vmatprep.subr.bf16.mxu0 %v486
    %815 = vmatpush1.bf16.msra.mxu0 %v485
    %816 = vmatprep.subr.bf16.mxu0 %v490
    %817 = vmatpush1.bf16.msra.mxu0 %v489
    %818 = vmatprep.subr.bf16.mxu0 %v494
    %819 = vmatpush1.bf16.msra.mxu0 %v493
    %820 = vmatprep.subr.bf16.mxu0 0
    %821 = vmatpush1.bf16.msra.mxu0 0
    %822 = vmatprep.subr.bf16.mxu0 0
    %823 = vmatpush1.bf16.msra.mxu0 0
    %824 = vmatprep.subr.bf16.mxu0 0
    %825 = vmatpush1.bf16.msra.mxu0 0
    %826 = vmatprep.subr.bf16.mxu0 0
    %827 = vmatpush1.bf16.msra.mxu0 0
    %828 = vmatprep.subr.bf16.mxu0 0
    %829 = vmatpush1.bf16.msra.mxu0 0
    %830 = vmatprep.subr.bf16.mxu0 0
    %831 = vmatpush1.bf16.msra.mxu0 0
    %832 = vmatprep.subr.bf16.mxu0 0
    %833 = vmatpush1.bf16.msra.mxu0 0
    %834 = vmatprep.subr.bf16.mxu0 0
    %835 = vmatpush1.bf16.msra.mxu0 0
    %836 = vmatprep.mubr.bf16.mxu0 0
    %837 = vmatmul.mubr.bf16.gmra.mrb[0].mxu0 %v762
    %v838 = vpop.f32.mrb[0].mxu0
    %v839 = vadd.f32 0.0, %v838
    %v840 = vpop.f32.mrb[0].mxu0
    %v841 = vadd.f32 0.0, %v840
    %v842 = vpop.f32.mrb[0].mxu0
    %v843 = vpop.f32.mrb[0].mxu0
    %844 = vdwg.mxu0
    %v845 = vadd.f32 %v758, %v798
    %v846 = vadd.f32 %v759, %v800
    %v847 = vadd.f32 %v760, %v839
    %v848 = vadd.f32 %v761, %v841
    %v849 = vsub.f32 0.0, %v845
    %v850 = vmul.f32 %v849, 1.442695
    %v851 = vpow.pop %v850
    %v852 = vadd.f32 %v851, 1.0
    %v853 = vrcp.pop %v852
    %v854 = vmul.f32 1.0, %v853
    %v855 = vsub.f32 0.0, %v846
    %v856 = vmul.f32 %v855, 1.442695
    %v857 = vpow.pop %v856
    %v858 = vadd.f32 %v857, 1.0
    %v859 = vrcp.pop %v858
    %v860 = vmul.f32 1.0, %v859
    %v861 = vtanh.pop %v847
    %v862 = vsub.f32 0.0, %v848
    %v863 = vmul.f32 %v862, 1.442695
    %v864 = vpow.pop %v863
    %v865 = vadd.f32 %v864, 1.0
    %v866 = vrcp.pop %v865
    %v867 = vmul.f32 1.0, %v866
    %v868 = vmul.f32 %v860, %v752
    %v869 = vmul.f32 %v854, %v861
    %v870 = vadd.f32 %v868, %v869
    %v871 = vtanh.pop %v870
    %v872 = vmul.f32 %v867, %v871
    %s873 = smul.u32 3, 4
    %s874 = smul.addr %s873, 8
    %s875 = scalar_lea.vmem [#allocation2], %s874
    %v876 = vld [vmem:[%s875] sm:$0xff]
    %v877 = vld [vmem:[%s875 + $0x8] sm:$0xff]
    %v878 = vld [vmem:[%s875 + $0x10] sm:$0xff]
    %v879 = vld [vmem:[%s875 + $0x18] sm:$0xff]
    %v880 = vpack.c.bf16 %v872, %v872
    %881 = vmatprep.subr.bf16.mxu0 %v464
    %882 = vmatpush1.bf16.msra.mxu0 %v463
    %883 = vmatprep.subr.bf16.mxu0 %v468
    %884 = vmatpush1.bf16.msra.mxu0 %v467
    %885 = vmatprep.subr.bf16.mxu0 %v472
    %886 = vmatpush1.bf16.msra.mxu0 %v471
    %887 = vmatprep.subr.bf16.mxu0 %v476
    %888 = vmatpush1.bf16.msra.mxu0 %v475
    %889 = vmatprep.subr.bf16.mxu0 %v480
    %890 = vmatpush1.bf16.msra.mxu0 %v479
    %891 = vmatprep.subr.bf16.mxu0 %v484
    %892 = vmatpush1.bf16.msra.mxu0 %v483
    %893 = vmatprep.subr.bf16.mxu0 %v488
    %894 = vmatpush1.bf16.msra.mxu0 %v487
    %895 = vmatprep.subr.bf16.mxu0 %v492
    %896 = vmatpush1.bf16.msra.mxu0 %v491
    %897 = vmatprep.subr.bf16.mxu0 0
    %898 = vmatpush1.bf16.msra.mxu0 0
    %899 = vmatprep.subr.bf16.mxu0 0
    %900 = vmatpush1.bf16.msra.mxu0 0
    %901 = vmatprep.subr.bf16.mxu0 0
    %902 = vmatpush1.bf16.msra.mxu0 0
    %903 = vmatprep.subr.bf16.mxu0 0
    %904 = vmatpush1.bf16.msra.mxu0 0
    %905 = vmatprep.subr.bf16.mxu0 0
    %906 = vmatpush1.bf16.msra.mxu0 0
    %907 = vmatprep.subr.bf16.mxu0 0
    %908 = vmatpush1.bf16.msra.mxu0 0
    %909 = vmatprep.subr.bf16.mxu0 0
    %910 = vmatpush1.bf16.msra.mxu0 0
    %911 = vmatprep.subr.bf16.mxu0 0
    %912 = vmatpush1.bf16.msra.mxu0 0
    %913 = vmatprep.mubr.bf16.mxu0 0
    %914 = vmatmul.mubr.bf16.gmra.mrb[0].mxu0 %v880
    %v915 = vpop.f32.mrb[0].mxu0
    %v916 = vadd.f32 0.0, %v915
    %v917 = vpop.f32.mrb[0].mxu0
    %v918 = vadd.f32 0.0, %v917
    %v919 = vpop.f32.mrb[0].mxu0
    %v920 = vpop.f32.mrb[0].mxu0
    %921 = vdwg.mxu0
    %922 = vmatprep.subr.bf16.mxu0 %v466
    %923 = vmatpush1.bf16.msra.mxu0 %v465
    %924 = vmatprep.subr.bf16.mxu0 %v470
    %925 = vmatpush1.bf16.msra.mxu0 %v469
    %926 = vmatprep.subr.bf16.mxu0 %v474
    %927 = vmatpush1.bf16.msra.mxu0 %v473
    %928 = vmatprep.subr.bf16.mxu0 %v478
    %929 = vmatpush1.bf16.msra.mxu0 %v477
    %930 = vmatprep.subr.bf16.mxu0 %v482
    %931 = vmatpush1.bf16.msra.mxu0 %v481
    %932 = vmatprep.subr.bf16.mxu0 %v486
    %933 = vmatpush1.bf16.msra.mxu0 %v485
    %934 = vmatprep.subr.bf16.mxu0 %v490
    %935 = vmatpush1.bf16.msra.mxu0 %v489
    %936 = vmatprep.subr.bf16.mxu0 %v494
    %937 = vmatpush1.bf16.msra.mxu0 %v493
    %938 = vmatprep.subr.bf16.mxu0 0
    %939 = vmatpush1.bf16.msra.mxu0 0
    %940 = vmatprep.subr.bf16.mxu0 0
    %941 = vmatpush1.bf16.msra.mxu0 0
    %942 = vmatprep.subr.bf16.mxu0 0
    %943 = vmatpush1.bf16.msra.mxu0 0
    %944 = vmatprep.subr.bf16.mxu0 0
    %945 = vmatpush1.bf16.msra.mxu0 0
    %946 = vmatprep.subr.bf16.mxu0 0
    %947 = vmatpush1.bf16.msra.mxu0 0
    %948 = vmatprep.subr.bf16.mxu0 0
    %949 = vmatpush1.bf16.msra.mxu0 0
    %950 = vmatprep.subr.bf16.mxu0 0
    %951 = vmatpush1.bf16.msra.mxu0 0
    %952 = vmatprep.subr.bf16.mxu0 0
    %953 = vmatpush1.bf16.msra.mxu0 0
    %954 = vmatprep.mubr.bf16.mxu0 0
    %955 = vmatmul.mubr.bf16.gmra.mrb[0].mxu0 %v880
    %v956 = vpop.f32.mrb[0].mxu0
    %v957 = vadd.f32 0.0, %v956
    %v958 = vpop.f32.mrb[0].mxu0
    %v959 = vadd.f32 0.0, %v958
    %v960 = vpop.f32.mrb[0].mxu0
    %v961 = vpop.f32.mrb[0].mxu0
    %962 = vdwg.mxu0
    %v963 = vadd.f32 %v876, %v916
    %v964 = vadd.f32 %v877, %v918
    %v965 = vadd.f32 %v878, %v957
    %v966 = vadd.f32 %v879, %v959
    %v967 = vsub.f32 0.0, %v963
    %v968 = vmul.f32 %v967, 1.442695
    %v969 = vpow.pop %v968
    %v970 = vadd.f32 %v969, 1.0
    %v971 = vrcp.pop %v970
    %v972 = vmul.f32 1.0, %v971
    %v973 = vsub.f32 0.0, %v964
    %v974 = vmul.f32 %v973, 1.442695
    %v975 = vpow.pop %v974
    %v976 = vadd.f32 %v975, 1.0
    %v977 = vrcp.pop %v976
    %v978 = vmul.f32 1.0, %v977
    %v979 = vtanh.pop %v965
    %v980 = vsub.f32 0.0, %v966
    %v981 = vmul.f32 %v980, 1.442695
    %v982 = vpow.pop %v981
    %v983 = vadd.f32 %v982, 1.0
    %v984 = vrcp.pop %v983
    %v985 = vmul.f32 1.0, %v984
    %v986 = vmul.f32 %v978, %v870
    %v987 = vmul.f32 %v972, %v979
    %v988 = vadd.f32 %v986, %v987
    %v989 = vtanh.pop %v988
    %v990 = vmul.f32 %v985, %v989
    %s991 = smul.u32 4, 4
    %s992 = smul.addr %s991, 8
    %s993 = scalar_lea.vmem [#allocation2], %s992
    %v994 = vld [vmem:[%s993] sm:$0xff]
    %v995 = vld [vmem:[%s993 + $0x8] sm:$0xff]
    %v996 = vld [vmem:[%s993 + $0x10] sm:$0xff]
    %v997 = vld [vmem:[%s993 + $0x18] sm:$0xff]
    %v998 = vpack.c.bf16 %v990, %v990
    %999 = vmatprep.subr.bf16.mxu0 %v464
    %1000 = vmatpush1.bf16.msra.mxu0 %v463
    %1001 = vmatprep.subr.bf16.mxu0 %v468
    %1002 = vmatpush1.bf16.msra.mxu0 %v467
    %1003 = vmatprep.subr.bf16.mxu0 %v472
    %1004 = vmatpush1.bf16.msra.mxu0 %v471
    %1005 = vmatprep.subr.bf16.mxu0 %v476
    %1006 = vmatpush1.bf16.msra.mxu0 %v475
    %1007 = vmatprep.subr.bf16.mxu0 %v480
    %1008 = vmatpush1.bf16.msra.mxu0 %v479
    %1009 = vmatprep.subr.bf16.mxu0 %v484
    %1010 = vmatpush1.bf16.msra.mxu0 %v483
    %1011 = vmatprep.subr.bf16.mxu0 %v488
    %1012 = vmatpush1.bf16.msra.mxu0 %v487
    %1013 = vmatprep.subr.bf16.mxu0 %v492
    %1014 = vmatpush1.bf16.msra.mxu0 %v491
    %1015 = vmatprep.subr.bf16.mxu0 0
    %1016 = vmatpush1.bf16.msra.mxu0 0
    %1017 = vmatprep.subr.bf16.mxu0 0
    %1018 = vmatpush1.bf16.msra.mxu0 0
    %1019 = vmatprep.subr.bf16.mxu0 0
    %1020 = vmatpush1.bf16.msra.mxu0 0
    %1021 = vmatprep.subr.bf16.mxu0 0
    %1022 = vmatpush1.bf16.msra.mxu0 0
    %1023 = vmatprep.subr.bf16.mxu0 0
    %1024 = vmatpush1.bf16.msra.mxu0 0
    %1025 = vmatprep.subr.bf16.mxu0 0
    %1026 = vmatpush1.bf16.msra.mxu0 0
    %1027 = vmatprep.subr.bf16.mxu0 0
    %1028 = vmatpush1.bf16.msra.mxu0 0
    %1029 = vmatprep.subr.bf16.mxu0 0
    %1030 = vmatpush1.bf16.msra.mxu0 0
    %1031 = vmatprep.mubr.bf16.mxu0 0
    %1032 = vmatmul.mubr.bf16.gmra.mrb[0].mxu0 %v998
    %v1033 = vpop.f32.mrb[0].mxu0
    %v1034 = vadd.f32 0.0, %v1033
    %v1035 = vpop.f32.mrb[0].mxu0
    %v1036 = vadd.f32 0.0, %v1035
    %v1037 = vpop.f32.mrb[0].mxu0
    %v1038 = vpop.f32.mrb[0].mxu0
    %1039 = vdwg.mxu0
    %1040 = vmatprep.subr.bf16.mxu0 %v466
    %1041 = vmatpush1.bf16.msra.mxu0 %v465
    %1042 = vmatprep.subr.bf16.mxu0 %v470
    %1043 = vmatpush1.bf16.msra.mxu0 %v469
    %1044 = vmatprep.subr.bf16.mxu0 %v474
    %1045 = vmatpush1.bf16.msra.mxu0 %v473
    %1046 = vmatprep.subr.bf16.mxu0 %v478
    %1047 = vmatpush1.bf16.msra.mxu0 %v477
    %1048 = vmatprep.subr.bf16.mxu0 %v482
    %1049 = vmatpush1.bf16.msra.mxu0 %v481
    %1050 = vmatprep.subr.bf16.mxu0 %v486
    %1051 = vmatpush1.bf16.msra.mxu0 %v485
    %1052 = vmatprep.subr.bf16.mxu0 %v490
    %1053 = vmatpush1.bf16.msra.mxu0 %v489
    %1054 = vmatprep.subr.bf16.mxu0 %v494
    %1055 = vmatpush1.bf16.msra.mxu0 %v493
    %1056 = vmatprep.subr.bf16.mxu0 0
    %1057 = vmatpush1.bf16.msra.mxu0 0
    %1058 = vmatprep.subr.bf16.mxu0 0
    %1059 = vmatpush1.bf16.msra.mxu0 0
    %1060 = vmatprep.subr.bf16.mxu0 0
    %1061 = vmatpush1.bf16.msra.mxu0 0
    %1062 = vmatprep.subr.bf16.mxu0 0
    %1063 = vmatpush1.bf16.msra.mxu0 0
    %1064 = vmatprep.subr.bf16.mxu0 0
    %1065 = vmatpush1.bf16.msra.mxu0 0
    %1066 = vmatprep.subr.bf16.mxu0 0
    %1067 = vmatpush1.bf16.msra.mxu0 0
    %1068 = vmatprep.subr.bf16.mxu0 0
    %1069 = vmatpush1.bf16.msra.mxu0 0
    %1070 = vmatprep.subr.bf16.mxu0 0
    %1071 = vmatpush1.bf16.msra.mxu0 0
    %1072 = vmatprep.mubr.bf16.mxu0 0
    %1073 = vmatmul.mubr.bf16.gmra.mrb[0].mxu0 %v998
    %v1074 = vpop.f32.mrb[0].mxu0
    %v1075 = vadd.f32 0.0, %v1074
    %v1076 = vpop.f32.mrb[0].mxu0
    %v1077 = vadd.f32 0.0, %v1076
    %v1078 = vpop.f32.mrb[0].mxu0
    %v1079 = vpop.f32.mrb[0].mxu0
    %1080 = vdwg.mxu0
    %v1081 = vadd.f32 %v994, %v1034
    %v1082 = vadd.f32 %v995, %v1036
    %v1083 = vadd.f32 %v996, %v1075
    %v1084 = vadd.f32 %v997, %v1077
    %v1085 = vsub.f32 0.0, %v1081
    %v1086 = vmul.f32 %v1085, 1.442695
    %v1087 = vpow.pop %v1086
    %v1088 = vadd.f32 %v1087, 1.0
    %v1089 = vrcp.pop %v1088
    %v1090 = vmul.f32 1.0, %v1089
    %v1091 = vsub.f32 0.0, %v1082
    %v1092 = vmul.f32 %v1091, 1.442695
    %v1093 = vpow.pop %v1092
    %v1094 = vadd.f32 %v1093, 1.0
    %v1095 = vrcp.pop %v1094
    %v1096 = vmul.f32 1.0, %v1095
    %v1097 = vtanh.pop %v1083
    %v1098 = vsub.f32 0.0, %v1084
    %v1099 = vmul.f32 %v1098, 1.442695
    %v1100 = vpow.pop %v1099
    %v1101 = vadd.f32 %v1100, 1.0
    %v1102 = vrcp.pop %v1101
    %v1103 = vmul.f32 1.0, %v1102
    %v1104 = vmul.f32 %v1096, %v988
    %v1105 = vmul.f32 %v1090, %v1097
    %v1106 = vadd.f32 %v1104, %v1105
    %v1107 = vtanh.pop %v1106
    %v1108 = vmul.f32 %v1103, %v1107
    %s1109 = smul.u32 5, 4
    %s1110 = smul.addr %s1109, 8
    %s1111 = scalar_lea.vmem [#allocation2], %s1110
    %v1112 = vld [vmem:[%s1111] sm:$0xff]
    %v1113 = vld [vmem:[%s1111 + $0x8] sm:$0xff]
    %v1114 = vld [vmem:[%s1111 + $0x10] sm:$0xff]
    %v1115 = vld [vmem:[%s1111 + $0x18] sm:$0xff]
    %v1116 = vpack.c.bf16 %v1108, %v1108
    %1117 = vmatprep.subr.bf16.mxu0 %v464
    %1118 = vmatpush1.bf16.msra.mxu0 %v463
    %1119 = vmatprep.subr.bf16.mxu0 %v468
    %1120 = vmatpush1.bf16.msra.mxu0 %v467
    %1121 = vmatprep.subr.bf16.mxu0 %v472
    %1122 = vmatpush1.bf16.msra.mxu0 %v471
    %1123 = vmatprep.subr.bf16.mxu0 %v476
    %1124 = vmatpush1.bf16.msra.mxu0 %v475
    %1125 = vmatprep.subr.bf16.mxu0 %v480
    %1126 = vmatpush1.bf16.msra.mxu0 %v479
    %1127 = vmatprep.subr.bf16.mxu0 %v484
    %1128 = vmatpush1.bf16.msra.mxu0 %v483
    %1129 = vmatprep.subr.bf16.mxu0 %v488
    %1130 = vmatpush1.bf16.msra.mxu0 %v487
    %1131 = vmatprep.subr.bf16.mxu0 %v492
    %1132 = vmatpush1.bf16.msra.mxu0 %v491
    %1133 = vmatprep.subr.bf16.mxu0 0
    %1134 = vmatpush1.bf16.msra.mxu0 0
    %1135 = vmatprep.subr.bf16.mxu0 0
    %1136 = vmatpush1.bf16.msra.mxu0 0
    %1137 = vmatprep.subr.bf16.mxu0 0
    %1138 = vmatpush1.bf16.msra.mxu0 0
    %1139 = vmatprep.subr.bf16.mxu0 0
    %1140 = vmatpush1.bf16.msra.mxu0 0
    %1141 = vmatprep.subr.bf16.mxu0 0
    %1142 = vmatpush1.bf16.msra.mxu0 0
    %1143 = vmatprep.subr.bf16.mxu0 0
    %1144 = vmatpush1.bf16.msra.mxu0 0
    %1145 = vmatprep.subr.bf16.mxu0 0
    %1146 = vmatpush1.bf16.msra.mxu0 0
    %1147 = vmatprep.subr.bf16.mxu0 0
    %1148 = vmatpush1.bf16.msra.mxu0 0
    %1149 = vmatprep.mubr.bf16.mxu0 0
    %1150 = vmatmul.mubr.bf16.gmra.mrb[0].mxu0 %v1116
    %v1151 = vpop.f32.mrb[0].mxu0
    %v1152 = vadd.f32 0.0, %v1151
    %v1153 = vpop.f32.mrb[0].mxu0
    %v1154 = vadd.f32 0.0, %v1153
    %v1155 = vpop.f32.mrb[0].mxu0
    %v1156 = vpop.f32.mrb[0].mxu0
    %1157 = vdwg.mxu0
    %1158 = vmatprep.subr.bf16.mxu0 %v466
    %1159 = vmatpush1.bf16.msra.mxu0 %v465
    %1160 = vmatprep.subr.bf16.mxu0 %v470
    %1161 = vmatpush1.bf16.msra.mxu0 %v469
    %1162 = vmatprep.subr.bf16.mxu0 %v474
    %1163 = vmatpush1.bf16.msra.mxu0 %v473
    %1164 = vmatprep.subr.bf16.mxu0 %v478
    %1165 = vmatpush1.bf16.msra.mxu0 %v477
    %1166 = vmatprep.subr.bf16.mxu0 %v482
    %1167 = vmatpush1.bf16.msra.mxu0 %v481
    %1168 = vmatprep.subr.bf16.mxu0 %v486
    %1169 = vmatpush1.bf16.msra.mxu0 %v485
    %1170 = vmatprep.subr.bf16.mxu0 %v490
    %1171 = vmatpush1.bf16.msra.mxu0 %v489
    %1172 = vmatprep.subr.bf16.mxu0 %v494
    %1173 = vmatpush1.bf16.msra.mxu0 %v493
    %1174 = vmatprep.subr.bf16.mxu0 0
    %1175 = vmatpush1.bf16.msra.mxu0 0
    %1176 = vmatprep.subr.bf16.mxu0 0
    %1177 = vmatpush1.bf16.msra.mxu0 0
    %1178 = vmatprep.subr.bf16.mxu0 0
    %1179 = vmatpush1.bf16.msra.mxu0 0
    %1180 = vmatprep.subr.bf16.mxu0 0
    %1181 = vmatpush1.bf16.msra.mxu0 0
    %1182 = vmatprep.subr.bf16.mxu0 0
    %1183 = vmatpush1.bf16.msra.mxu0 0
    %1184 = vmatprep.subr.bf16.mxu0 0
    %1185 = vmatpush1.bf16.msra.mxu0 0
    %1186 = vmatprep.subr.bf16.mxu0 0
    %1187 = vmatpush1.bf16.msra.mxu0 0
    %1188 = vmatprep.subr.bf16.mxu0 0
    %1189 = vmatpush1.bf16.msra.mxu0 0
    %1190 = vmatprep.mubr.bf16.mxu0 0
    %1191 = vmatmul.mubr.bf16.gmra.mrb[0].mxu0 %v1116
    %v1192 = vpop.f32.mrb[0].mxu0
    %v1193 = vadd.f32 0.0, %v1192
    %v1194 = vpop.f32.mrb[0].mxu0
    %v1195 = vadd.f32 0.0, %v1194
    %v1196 = vpop.f32.mrb[0].mxu0
    %v1197 = vpop.f32.mrb[0].mxu0
    %1198 = vdwg.mxu0
    %v1199 = vadd.f32 %v1112, %v1152
    %v1200 = vadd.f32 %v1113, %v1154
    %v1201 = vadd.f32 %v1114, %v1193
    %v1202 = vadd.f32 %v1115, %v1195
    %v1203 = vsub.f32 0.0, %v1199
    %v1204 = vmul.f32 %v1203, 1.442695
    %v1205 = vpow.pop %v1204
    %v1206 = vadd.f32 %v1205, 1.0
    %v1207 = vrcp.pop %v1206
    %v1208 = vmul.f32 1.0, %v1207
    %v1209 = vsub.f32 0.0, %v1200
    %v1210 = vmul.f32 %v1209, 1.442695
    %v1211 = vpow.pop %v1210
    %v1212 = vadd.f32 %v1211, 1.0
    %v1213 = vrcp.pop %v1212
    %v1214 = vmul.f32 1.0, %v1213
    %v1215 = vtanh.pop %v1201
    %v1216 = vsub.f32 0.0, %v1202
    %v1217 = vmul.f32 %v1216, 1.442695
    %v1218 = vpow.pop %v1217
    %v1219 = vadd.f32 %v1218, 1.0
    %v1220 = vrcp.pop %v1219
    %v1221 = vmul.f32 1.0, %v1220
    %v1222 = vmul.f32 %v1214, %v1106
    %v1223 = vmul.f32 %v1208, %v1215
    %v1224 = vadd.f32 %v1222, %v1223
    %v1225 = vtanh.pop %v1224
    %v1226 = vmul.f32 %v1221, %v1225
    %s1227 = smul.u32 6, 4
    %s1228 = smul.addr %s1227, 8
    %s1229 = scalar_lea.vmem [#allocation2], %s1228
    %v1230 = vld [vmem:[%s1229] sm:$0xff]
    %v1231 = vld [vmem:[%s1229 + $0x8] sm:$0xff]
    %v1232 = vld [vmem:[%s1229 + $0x10] sm:$0xff]
    %v1233 = vld [vmem:[%s1229 + $0x18] sm:$0xff]
    %v1234 = vpack.c.bf16 %v1226, %v1226
    %1235 = vmatprep.subr.bf16.mxu0 %v464
    %1236 = vmatpush1.bf16.msra.mxu0 %v463
    %1237 = vmatprep.subr.bf16.mxu0 %v468
    %1238 = vmatpush1.bf16.msra.mxu0 %v467
    %1239 = vmatprep.subr.bf16.mxu0 %v472
    %1240 = vmatpush1.bf16.msra.mxu0 %v471
    %1241 = vmatprep.subr.bf16.mxu0 %v476
    %1242 = vmatpush1.bf16.msra.mxu0 %v475
    %1243 = vmatprep.subr.bf16.mxu0 %v480
    %1244 = vmatpush1.bf16.msra.mxu0 %v479
    %1245 = vmatprep.subr.bf16.mxu0 %v484
    %1246 = vmatpush1.bf16.msra.mxu0 %v483
    %1247 = vmatprep.subr.bf16.mxu0 %v488
    %1248 = vmatpush1.bf16.msra.mxu0 %v487
    %1249 = vmatprep.subr.bf16.mxu0 %v492
    %1250 = vmatpush1.bf16.msra.mxu0 %v491
    %1251 = vmatprep.subr.bf16.mxu0 0
    %1252 = vmatpush1.bf16.msra.mxu0 0
    %1253 = vmatprep.subr.bf16.mxu0 0
    %1254 = vmatpush1.bf16.msra.mxu0 0
    %1255 = vmatprep.subr.bf16.mxu0 0
    %1256 = vmatpush1.bf16.msra.mxu0 0
    %1257 = vmatprep.subr.bf16.mxu0 0
    %1258 = vmatpush1.bf16.msra.mxu0 0
    %1259 = vmatprep.subr.bf16.mxu0 0
    %1260 = vmatpush1.bf16.msra.mxu0 0
    %1261 = vmatprep.subr.bf16.mxu0 0
    %1262 = vmatpush1.bf16.msra.mxu0 0
    %1263 = vmatprep.subr.bf16.mxu0 0
    %1264 = vmatpush1.bf16.msra.mxu0 0
    %1265 = vmatprep.subr.bf16.mxu0 0
    %1266 = vmatpush1.bf16.msra.mxu0 0
    %1267 = vmatprep.mubr.bf16.mxu0 0
    %1268 = vmatmul.mubr.bf16.gmra.mrb[0].mxu0 %v1234
    %v1269 = vpop.f32.mrb[0].mxu0
    %v1270 = vadd.f32 0.0, %v1269
    %v1271 = vpop.f32.mrb[0].mxu0
    %v1272 = vadd.f32 0.0, %v1271
    %v1273 = vpop.f32.mrb[0].mxu0
    %v1274 = vpop.f32.mrb[0].mxu0
    %1275 = vdwg.mxu0
    %1276 = vmatprep.subr.bf16.mxu0 %v466
    %1277 = vmatpush1.bf16.msra.mxu0 %v465
    %1278 = vmatprep.subr.bf16.mxu0 %v470
    %1279 = vmatpush1.bf16.msra.mxu0 %v469
    %1280 = vmatprep.subr.bf16.mxu0 %v474
    %1281 = vmatpush1.bf16.msra.mxu0 %v473
    %1282 = vmatprep.subr.bf16.mxu0 %v478
    %1283 = vmatpush1.bf16.msra.mxu0 %v477
    %1284 = vmatprep.subr.bf16.mxu0 %v482
    %1285 = vmatpush1.bf16.msra.mxu0 %v481
    %1286 = vmatprep.subr.bf16.mxu0 %v486
    %1287 = vmatpush1.bf16.msra.mxu0 %v485
    %1288 = vmatprep.subr.bf16.mxu0 %v490
    %1289 = vmatpush1.bf16.msra.mxu0 %v489
    %1290 = vmatprep.subr.bf16.mxu0 %v494
    %1291 = vmatpush1.bf16.msra.mxu0 %v493
    %1292 = vmatprep.subr.bf16.mxu0 0
    %1293 = vmatpush1.bf16.msra.mxu0 0
    %1294 = vmatprep.subr.bf16.mxu0 0
    %1295 = vmatpush1.bf16.msra.mxu0 0
    %1296 = vmatprep.subr.bf16.mxu0 0
    %1297 = vmatpush1.bf16.msra.mxu0 0
    %1298 = vmatprep.subr.bf16.mxu0 0
    %1299 = vmatpush1.bf16.msra.mxu0 0
    %1300 = vmatprep.subr.bf16.mxu0 0
    %1301 = vmatpush1.bf16.msra.mxu0 0
    %1302 = vmatprep.subr.bf16.mxu0 0
    %1303 = vmatpush1.bf16.msra.mxu0 0
    %1304 = vmatprep.subr.bf16.mxu0 0
    %1305 = vmatpush1.bf16.msra.mxu0 0
    %1306 = vmatprep.subr.bf16.mxu0 0
    %1307 = vmatpush1.bf16.msra.mxu0 0
    %1308 = vmatprep.mubr.bf16.mxu0 0
    %1309 = vmatmul.mubr.bf16.gmra.mrb[0].mxu0 %v1234
    %v1310 = vpop.f32.mrb[0].mxu0
    %v1311 = vadd.f32 0.0, %v1310
    %v1312 = vpop.f32.mrb[0].mxu0
    %v1313 = vadd.f32 0.0, %v1312
    %v1314 = vpop.f32.mrb[0].mxu0
    %v1315 = vpop.f32.mrb[0].mxu0
    %1316 = vdwg.mxu0
    %v1317 = vadd.f32 %v1230, %v1270
    %v1318 = vadd.f32 %v1231, %v1272
    %v1319 = vadd.f32 %v1232, %v1311
    %v1320 = vadd.f32 %v1233, %v1313
    %v1321 = vsub.f32 0.0, %v1317
    %v1322 = vmul.f32 %v1321, 1.442695
    %v1323 = vpow.pop %v1322
    %v1324 = vadd.f32 %v1323, 1.0
    %v1325 = vrcp.pop %v1324
    %v1326 = vmul.f32 1.0, %v1325
    %v1327 = vsub.f32 0.0, %v1318
    %v1328 = vmul.f32 %v1327, 1.442695
    %v1329 = vpow.pop %v1328
    %v1330 = vadd.f32 %v1329, 1.0
    %v1331 = vrcp.pop %v1330
    %v1332 = vmul.f32 1.0, %v1331
    %v1333 = vtanh.pop %v1319
    %v1334 = vsub.f32 0.0, %v1320
    %v1335 = vmul.f32 %v1334, 1.442695
    %v1336 = vpow.pop %v1335
    %v1337 = vadd.f32 %v1336, 1.0
    %v1338 = vrcp.pop %v1337
    %v1339 = vmul.f32 1.0, %v1338
    %v1340 = vmul.f32 %v1332, %v1224
    %v1341 = vmul.f32 %v1326, %v1333
    %v1342 = vadd.f32 %v1340, %v1341
    %v1343 = vtanh.pop %v1342
    %v1344 = vmul.f32 %v1339, %v1343
    %s1345 = smul.u32 7, 4
    %s1346 = smul.addr %s1345, 8
    %s1347 = scalar_lea.vmem [#allocation2], %s1346
    %v1348 = vld [vmem:[%s1347] sm:$0xff]
    %v1349 = vld [vmem:[%s1347 + $0x8] sm:$0xff]
    %v1350 = vld [vmem:[%s1347 + $0x10] sm:$0xff]
    %v1351 = vld [vmem:[%s1347 + $0x18] sm:$0xff]
    %v1352 = vpack.c.bf16 %v1344, %v1344
    %1353 = vmatprep.subr.bf16.mxu0 %v464
    %1354 = vmatpush1.bf16.msra.mxu0 %v463
    %1355 = vmatprep.subr.bf16.mxu0 %v468
    %1356 = vmatpush1.bf16.msra.mxu0 %v467
    %1357 = vmatprep.subr.bf16.mxu0 %v472
    %1358 = vmatpush1.bf16.msra.mxu0 %v471
    %1359 = vmatprep.subr.bf16.mxu0 %v476
    %1360 = vmatpush1.bf16.msra.mxu0 %v475
    %1361 = vmatprep.subr.bf16.mxu0 %v480
    %1362 = vmatpush1.bf16.msra.mxu0 %v479
    %1363 = vmatprep.subr.bf16.mxu0 %v484
    %1364 = vmatpush1.bf16.msra.mxu0 %v483
    %1365 = vmatprep.subr.bf16.mxu0 %v488
    %1366 = vmatpush1.bf16.msra.mxu0 %v487
    %1367 = vmatprep.subr.bf16.mxu0 %v492
    %1368 = vmatpush1.bf16.msra.mxu0 %v491
    %1369 = vmatprep.subr.bf16.mxu0 0
    %1370 = vmatpush1.bf16.msra.mxu0 0
    %1371 = vmatprep.subr.bf16.mxu0 0
    %1372 = vmatpush1.bf16.msra.mxu0 0
    %1373 = vmatprep.subr.bf16.mxu0 0
    %1374 = vmatpush1.bf16.msra.mxu0 0
    %1375 = vmatprep.subr.bf16.mxu0 0
    %1376 = vmatpush1.bf16.msra.mxu0 0
    %1377 = vmatprep.subr.bf16.mxu0 0
    %1378 = vmatpush1.bf16.msra.mxu0 0
    %1379 = vmatprep.subr.bf16.mxu0 0
    %1380 = vmatpush1.bf16.msra.mxu0 0
    %1381 = vmatprep.subr.bf16.mxu0 0
    %1382 = vmatpush1.bf16.msra.mxu0 0
    %1383 = vmatprep.subr.bf16.mxu0 0
    %1384 = vmatpush1.bf16.msra.mxu0 0
    %1385 = vmatprep.mubr.bf16.mxu0 0
    %1386 = vmatmul.mubr.bf16.gmra.mrb[0].mxu0 %v1352
    %v1387 = vpop.f32.mrb[0].mxu0
    %v1388 = vadd.f32 0.0, %v1387
    %v1389 = vpop.f32.mrb[0].mxu0
    %v1390 = vadd.f32 0.0, %v1389
    %v1391 = vpop.f32.mrb[0].mxu0
    %v1392 = vpop.f32.mrb[0].mxu0
    %1393 = vdwg.mxu0
    %1394 = vmatprep.subr.bf16.mxu0 %v466
    %1395 = vmatpush1.bf16.msra.mxu0 %v465
    %1396 = vmatprep.subr.bf16.mxu0 %v470
    %1397 = vmatpush1.bf16.msra.mxu0 %v469
    %1398 = vmatprep.subr.bf16.mxu0 %v474
    %1399 = vmatpush1.bf16.msra.mxu0 %v473
    %1400 = vmatprep.subr.bf16.mxu0 %v478
    %1401 = vmatpush1.bf16.msra.mxu0 %v477
    %1402 = vmatprep.subr.bf16.mxu0 %v482
    %1403 = vmatpush1.bf16.msra.mxu0 %v481
    %1404 = vmatprep.subr.bf16.mxu0 %v486
    %1405 = vmatpush1.bf16.msra.mxu0 %v485
    %1406 = vmatprep.subr.bf16.mxu0 %v490
    %1407 = vmatpush1.bf16.msra.mxu0 %v489
    %1408 = vmatprep.subr.bf16.mxu0 %v494
    %1409 = vmatpush1.bf16.msra.mxu0 %v493
    %1410 = vmatprep.subr.bf16.mxu0 0
    %1411 = vmatpush1.bf16.msra.mxu0 0
    %1412 = vmatprep.subr.bf16.mxu0 0
    %1413 = vmatpush1.bf16.msra.mxu0 0
    %1414 = vmatprep.subr.bf16.mxu0 0
    %1415 = vmatpush1.bf16.msra.mxu0 0
    %1416 = vmatprep.subr.bf16.mxu0 0
    %1417 = vmatpush1.bf16.msra.mxu0 0
    %1418 = vmatprep.subr.bf16.mxu0 0
    %1419 = vmatpush1.bf16.msra.mxu0 0
    %1420 = vmatprep.subr.bf16.mxu0 0
    %1421 = vmatpush1.bf16.msra.mxu0 0
    %1422 = vmatprep.subr.bf16.mxu0 0
    %1423 = vmatpush1.bf16.msra.mxu0 0
    %1424 = vmatprep.subr.bf16.mxu0 0
    %1425 = vmatpush1.bf16.msra.mxu0 0
    %1426 = vmatprep.mubr.bf16.mxu0 0
    %1427 = vmatmul.mubr.bf16.gmra.mrb[0].mxu0 %v1352
    %v1428 = vpop.f32.mrb[0].mxu0
    %v1429 = vadd.f32 0.0, %v1428
    %v1430 = vpop.f32.mrb[0].mxu0
    %v1431 = vadd.f32 0.0, %v1430
    %v1432 = vpop.f32.mrb[0].mxu0
    %v1433 = vpop.f32.mrb[0].mxu0
    %1434 = vdwg.mxu0
    %v1435 = vadd.f32 %v1348, %v1388
    %v1436 = vadd.f32 %v1349, %v1390
    %v1437 = vadd.f32 %v1350, %v1429
    %v1438 = vadd.f32 %v1351, %v1431
    %v1439 = vsub.f32 0.0, %v1435
    %v1440 = vmul.f32 %v1439, 1.442695
    %v1441 = vpow.pop %v1440
    %v1442 = vadd.f32 %v1441, 1.0
    %v1443 = vrcp.pop %v1442
    %v1444 = vmul.f32 1.0, %v1443
    %v1445 = vsub.f32 0.0, %v1436
    %v1446 = vmul.f32 %v1445, 1.442695
    %v1447 = vpow.pop %v1446
    %v1448 = vadd.f32 %v1447, 1.0
    %v1449 = vrcp.pop %v1448
    %v1450 = vmul.f32 1.0, %v1449
    %v1451 = vtanh.pop %v1437
    %v1452 = vsub.f32 0.0, %v1438
    %v1453 = vmul.f32 %v1452, 1.442695
    %v1454 = vpow.pop %v1453
    %v1455 = vadd.f32 %v1454, 1.0
    %v1456 = vrcp.pop %v1455
    %v1457 = vmul.f32 1.0, %v1456
    %v1458 = vmul.f32 %v1450, %v1342
    %v1459 = vmul.f32 %v1444, %v1451
    %v1460 = vadd.f32 %v1458, %v1459
    %v1461 = vtanh.pop %v1460
    %v1462 = vmul.f32 %v1457, %v1461
    %1463 = vst [vmem:[#allocation3] sm:$0xff] %v1462
    %1464 = vst [vmem:[#allocation4] sm:$0xff] %v1460
    // Predicated region
    $region38: #{tpu_custom_call.1} parent=1 // pred_check
      %p1465 = pneg %p53
    $region39: #{tpu_custom_call.1} parent=1 // pred_check_branch
      %1467 = sbr.rel (%p1465) target = $region41
    $region40: #{tpu_custom_call.1} parent=1 // pred_region
      %v1468 = vpack.c.bf16 %v1462, %v1462
      %v1469 = vld [vmem:[#allocation8] sm:$0xf]
      %v1470 = vld [vmem:[#allocation8 + $0x4] sm:$0xf]
      %v1471 = vld [vmem:[#allocation8 + $0x8] sm:$0xf]
      %v1472 = vld [vmem:[#allocation8 + $0xc] sm:$0xf]
      %v1473 = vld [vmem:[#allocation8 + $0x10] sm:$0xf]
      %v1474 = vld [vmem:[#allocation8 + $0x14] sm:$0xf]
      %v1475 = vld [vmem:[#allocation8 + $0x18] sm:$0xf]
      %v1476 = vld [vmem:[#allocation8 + $0x1c] sm:$0xf]
      %v1477 = vld [vmem:[#allocation8 + $0x20] sm:$0xf]
      %v1478 = vld [vmem:[#allocation8 + $0x24] sm:$0xf]
      %v1479 = vld [vmem:[#allocation8 + $0x28] sm:$0xf]
      %v1480 = vld [vmem:[#allocation8 + $0x2c] sm:$0xf]
      %v1481 = vld [vmem:[#allocation8 + $0x30] sm:$0xf]
      %v1482 = vld [vmem:[#allocation8 + $0x34] sm:$0xf]
      %v1483 = vld [vmem:[#allocation8 + $0x38] sm:$0xf]
      %v1484 = vld [vmem:[#allocation8 + $0x3c] sm:$0xf]
      %v1485 = vld [vmem:[%s5] sm:$0x1]
      %v1487 = vlaneseq
      %v1488 = vshrl.u32 %v1487, 7
      %v1489 = vsub.s32 0, %v1488
      %v1490 = vrot.slane %v1485, %v1489
      %v1508 = vunpack.c.l.b16 %v1469
      %v1509 = vunpack.c.l.b16 %v1470
      %v1510 = vunpack.c.l.b16 %v1471
      %v1511 = vunpack.c.l.b16 %v1472
      %v1512 = vunpack.c.l.b16 %v1473
      %v1513 = vunpack.c.l.b16 %v1474
      %v1514 = vunpack.c.l.b16 %v1475
      %v1515 = vunpack.c.l.b16 %v1476
      %v1516 = vunpack.c.l.b16 %v1477
      %v1517 = vunpack.c.l.b16 %v1478
      %v1518 = vunpack.c.l.b16 %v1479
      %v1519 = vunpack.c.l.b16 %v1480
      %v1520 = vunpack.c.l.b16 %v1481
      %v1521 = vunpack.c.l.b16 %v1482
      %v1522 = vunpack.c.l.b16 %v1483
      %v1523 = vunpack.c.l.b16 %v1484
      %v1524 = vpack.c.b16 %v1509, %v1508
      %v1525 = vpack.c.b16 %v1511, %v1510
      %v1526 = vpack.c.b16 %v1513, %v1512
      %v1527 = vpack.c.b16 %v1515, %v1514
      %v1528 = vpack.c.b16 %v1517, %v1516
      %v1529 = vpack.c.b16 %v1519, %v1518
      %v1530 = vpack.c.b16 %v1521, %v1520
      %v1531 = vpack.c.b16 %v1523, %v1522
      %1540 = vmatprep.subr.bf16.mxu0 0
      %1541 = vmatpush1.bf16.msra.mxu0 %v1524
      %1542 = vmatprep.subr.bf16.mxu0 0
      %1543 = vmatpush1.bf16.msra.mxu0 %v1525
      %1544 = vmatprep.subr.bf16.mxu0 0
      %1545 = vmatpush1.bf16.msra.mxu0 %v1526
      %1546 = vmatprep.subr.bf16.mxu0 0
      %1547 = vmatpush1.bf16.msra.mxu0 %v1527
      %1548 = vmatprep.subr.bf16.mxu0 0
      %1549 = vmatpush1.bf16.msra.mxu0 %v1528
      %1550 = vmatprep.subr.bf16.mxu0 0
      %1551 = vmatpush1.bf16.msra.mxu0 %v1529
      %1552 = vmatprep.subr.bf16.mxu0 0
      %1553 = vmatpush1.bf16.msra.mxu0 %v1530
      %1554 = vmatprep.subr.bf16.mxu0 0
      %1555 = vmatpush1.bf16.msra.mxu0 %v1531
      %1556 = vmatprep.subr.bf16.mxu0 0
      %1557 = vmatpush1.bf16.msra.mxu0 0
      %1558 = vmatprep.subr.bf16.mxu0 0
      %1559 = vmatpush1.bf16.msra.mxu0 0
      %1560 = vmatprep.subr.bf16.mxu0 0
      %1561 = vmatpush1.bf16.msra.mxu0 0
      %1562 = vmatprep.subr.bf16.mxu0 0
      %1563 = vmatpush1.bf16.msra.mxu0 0
      %1564 = vmatprep.subr.bf16.mxu0 0
      %1565 = vmatpush1.bf16.msra.mxu0 0
      %1566 = vmatprep.subr.bf16.mxu0 0
      %1567 = vmatpush1.bf16.msra.mxu0 0
      %1568 = vmatprep.subr.bf16.mxu0 0
      %1569 = vmatpush1.bf16.msra.mxu0 0
      %1570 = vmatprep.subr.bf16.mxu0 0
      %1571 = vmatpush1.bf16.msra.mxu0 0
      %1572 = vmatprep.mubr.bf16.mxu0 0
      %1573 = vmatmul.mubr.bf16.gmra.mrb[0].mxu0 %v1468
      %v1574 = vpop.f32.mrb[0].mxu0
      %v1575 = vadd.f32 %v1490, %v1574
      %v1576 = vpop.f32.mrb[0].mxu0
      %v1577 = vpop.f32.mrb[0].mxu0
      %v1578 = vpop.f32.mrb[0].mxu0
      %1579 = vdwg.mxu0
      %1580 = vst [vmem:[#allocation10] sm:$0xff] %v1575
    $region41: #{tpu_custom_call.1} parent=1 // pred_fallthru
      _
    // Predicated region
    $region42: #{tpu_custom_call.1} parent=1 // pred_check
      _
    $region43: #{tpu_custom_call.1} parent=1 // pred_check_branch
      %1582 = sbr.rel (0) target = $region45
    $region44: #{tpu_custom_call.1} parent=1 // pred_region
      %s1584 = ssub.s32 128, 128
      %1585 = vsyncadd [#allocation7], %s1584
      %s1587 = sshll.u32 [#allocation10], 4
      %s1588 = int_to_ptr.vmem [resolvable:$true] %s1587
      %1590 = dma.vmem_to_hbm [thread:$0]  %s1588, 128, %s6, [#allocation7]
    $region45: #{tpu_custom_call.1} parent=1 // pred_fallthru
      _
    // Predicated region
    $region46: #{tpu_custom_call.1} parent=1 // pred_check
      _
    $region47: #{tpu_custom_call.1} parent=1 // pred_check_branch
      %1592 = sbr.rel (0) target = $region49
    $region48: #{tpu_custom_call.1} parent=1 // pred_region
      %1593 = dma.done [#allocation7], 128
    $region49: #{tpu_custom_call.1} parent=1 // pred_fallthru
      _
    %1594 = vsyncpa [#allocation6], 1
    %1595 = vsyncpa [#allocation9], 1
    %1596 = vsyncpa [#allocation7], 1

</llo_original>
